<compile_context>
chip_gen: v7x
topology: tpu7x:2x2x1
jax: 0.10.0
libtpu: 0.0.40
codegen_flags: <defaults>
</compile_context>

<pallas_src>
import numpy as np

import jax
import jax.numpy as jnp
from jax.experimental import pallas as pl
from jax.experimental.pallas import tpu as pltpu


CONV_CHANNELS = [8, 16]
FC_LAYERS = [32, 32]          # last entry lives inside end_layers
NUM_CLASSES = 10
INPUT_SIZE = 16
BN_EPS = 1e-5
OUT_PAD = 128                 # lane-dense padded logits slab width
FIN_COL = 64                  # final logits live in columns FIN_COL..FIN_COL+9


# -----------------------------------------------------------------------------
# Fused Pallas kernel
# -----------------------------------------------------------------------------
def _conv_block_banded(xpad_ref, b_ref, s_row, t_row):
    """Conv3x3(pad=1, stride=1) + folded BN + ReLU + width half of 2x2 max-pool.

    xpad_ref : (N, H+2, K) f32 ref; rows 0 / H+1 are the zero height halo,
               row r+1 holds image row r.  K = (width x in-channels) lanes.
    b_ref    : (3, K, 2*Cout*W/2) bf16 merged-parity banded weights.  Columns
               [0, Cout*W/2) are even output widths, [Cout*W/2, 2*Cout*W/2)
               odd; within each half column = co*(W/2) + w'.  Width zero
               padding and the channel interleave are folded in offline.
    s_row, t_row : (1, 2*Cout*W/2) f32 folded BatchNorm scale / shift rows.
    Returns (N*H, Cout*W/2) f32: BN+ReLU'd conv output, max-pooled over width.
    """
    n = xpad_ref.shape[0]
    h = xpad_ref.shape[1] - 2
    k = xpad_ref.shape[2]
    cols = b_ref.shape[2]
    half = cols // 2

    acc = jnp.zeros((n * h, cols), jnp.float32)
    for ky in range(3):                         # unrolled: 3 lane-dense matmuls
        x_ky = xpad_ref[:, ky:ky + h, :].reshape(n * h, k).astype(jnp.bfloat16)
        acc = acc + jnp.dot(x_ky, b_ref[ky],
                            preferred_element_type=jnp.float32)

    y = jnp.maximum(acc * s_row + t_row, 0.0)        # BN + ReLU on 128 lanes
    y_swapped = pltpu.roll(y, shift=half, axis=1)    # swap parity halves (XLU)
    return jnp.maximum(y, y_swapped)[:, :half]       # width half of max-pool


def vgg_sdn_kernel(xs_ref, b1_ref, s1_ref, t1_ref, b2_ref, s2_ref, t2_ref,
                   w1h_ref, fb1_ref, wic_ref, we1_ref, be1_ref, we2_ref,
                   bout_ref, out_ref, scr2):
    n = xs_ref.shape[0]
    h1 = xs_ref.shape[1] - 2              # 16
    h2 = h1 // 2                          # 8
    h3 = h2 // 2                          # 4
    k2 = scr2.shape[2]                    # 64

    # ----- ConvBlock 1: conv3x3 + BN + ReLU + maxpool2 (input pre-padded) ----
    p1 = _conv_block_banded(xs_ref, b1_ref, s1_ref[...], t1_ref[...])
    # height half of the 2x2 max-pool (rows n*16+y -> n*8+y')
    p1 = p1.reshape(n * h2, 2, p1.shape[-1])
    p1 = jnp.maximum(p1[:, 0, :], p1[:, 1, :])             # (n*8, 64)

    # ----- ConvBlock 2 --------------------------------------------------------
    # zero only the two halo rows (no full-scratch memset)
    scr2[:, 0:1, :] = jnp.zeros((n, 1, k2), jnp.float32)
    scr2[:, h2 + 1:h2 + 2, :] = jnp.zeros((n, 1, k2), jnp.float32)
    scr2[:, 1:h2 + 1, :] = p1.reshape(n, h2, k2)
    p2 = _conv_block_banded(scr2, b2_ref, s2_ref[...], t2_ref[...])
    p2 = p2.reshape(n * h3, 2, p2.shape[-1])
    p2 = jnp.maximum(p2[:, 0, :], p2[:, 1, :])             # (n*4, 64)

    # ----- FcBlockWOutput: flatten (folded into w1h) + Linear + ReLU ----------
    # (+ Dropout == identity in eval mode)
    p2v = p2.reshape(n, h3, p2.shape[-1]).astype(jnp.bfloat16)
    fwd = jnp.zeros((n, fb1_ref.shape[1]), jnp.float32)
    for hh in range(h3):                                   # 4 small matmuls
        fwd = fwd + jnp.dot(p2v[:, hh, :], w1h_ref[hh],
                            preferred_element_type=jnp.float32)
    fwd = jnp.maximum(fwd + fb1_ref[...], 0.0)
    fwd_b = fwd.astype(jnp.bfloat16)

    # end_layers: Linear -> Dropout(identity) -> Linear (no ReLU, per reference)
    hmid = (jnp.dot(fwd_b, we1_ref[...],
                    preferred_element_type=jnp.float32) + be1_ref[...])

    # Single lane-dense store: IC logits in cols [0,10), final in [64,74).
    # wic / we2 are zero-padded offline so the two matmul results are disjoint.
    out_ref[...] = (jnp.dot(fwd_b, wic_ref[...],
                            preferred_element_type=jnp.float32)
                    + jnp.dot(hmid.astype(jnp.bfloat16), we2_ref[...],
                              preferred_element_type=jnp.float32)
                    + bout_ref[...])


# -----------------------------------------------------------------------------
# Wrapper (single pallas_call, whole arrays as single VMEM blocks, no grid)
# -----------------------------------------------------------------------------
def vgg_sdn_forward(x_nchw, params):
    """Full VGG_SDN forward; returns [[ic_logits], final_logits]."""
    n, c, h, w = x_nchw.shape
    # Glue (fused by XLA): NCHW -> NHWC, the free (W,C)->W*C lane merge and the
    # conv1 height zero-halo.  Conv width padding, the width half of the pools,
    # the NCHW flatten before fc1 and all bias/BN folding live inside the fused
    # kernel / the pre-permuted weights.
    xs = jnp.transpose(x_nchw, (0, 2, 3, 1)).reshape(n, h, w * c)
    xs = jnp.pad(xs, ((0, 0), (1, 1), (0, 0)))

    c1, c2 = CONV_CHANNELS
    k1, k2 = w * c, c1 * (w // 2)
    flops = 2 * (3 * (n * h) * k1 * (2 * c1 * (w // 2))
                 + 3 * (n * (h // 2)) * k2 * (2 * c2 * (w // 4))
                 + (h // 4) * n * k2 * FC_LAYERS[0]
                 + n * FC_LAYERS[0] * OUT_PAD
                 + n * FC_LAYERS[0] * FC_LAYERS[1]
                 + n * FC_LAYERS[1] * OUT_PAD)
    bytes_accessed = int(xs.size * 4 + n * OUT_PAD * 4
                         + sum(int(np.prod(v.shape)) * v.dtype.itemsize
                               for v in params.values()))

    # TODO(synk): if the deployment batch grows beyond the toy N=2, add a
    # leading "parallel" batch grid axis so both v7x TensorCores are used.
    out = pl.pallas_call(
        vgg_sdn_kernel,
        out_shape=jax.ShapeDtypeStruct((n, OUT_PAD), jnp.float32),
        scratch_shapes=[
            pltpu.VMEM((n, h // 2 + 2, k2), jnp.float32),   # padded conv2 input
        ],
        cost_estimate=pl.CostEstimate(flops=flops, transcendentals=0,
                                      bytes_accessed=bytes_accessed),
    )(xs, params["b1"], params["s1"], params["t1"],
      params["b2"], params["s2"], params["t2"],
      params["w1h"], params["fb1"], params["wic"],
      params["we1"], params["be1"], params["we2"], params["bout"])

    ic = out[:, :NUM_CLASSES]
    fin = out[:, FIN_COL:FIN_COL + NUM_CLASSES]
    return [[ic], fin]


# -----------------------------------------------------------------------------
# Parameter construction (mirrors VGG_SDN.initialize_weights, then folds the
# layout / padding / pooling bookkeeping into the weights offline)
# -----------------------------------------------------------------------------
def _build_conv_banded(w, w_in, in_lane):
    """Merged-parity banded weights for a 3x3 same-conv as 3 (ky) matmuls.

    Output column = parity*Cout*half + co*half + w', with the real output
    width w = 2*w' + parity and half = w_in//2.  Width zero-padding is folded
    in (out-of-range taps are omitted).
    """
    c_out, c_in = w.shape[0], w.shape[1]
    half = w_in // 2
    b = np.zeros((3, c_in * w_in, 2 * c_out * half), np.float32)
    for ky in range(3):
        for par in range(2):
            base = par * c_out * half
            for wp in range(half):
                wo = 2 * wp + par
                for kx in range(3):
                    wi = wo + kx - 1
                    if 0 <= wi < w_in:
                        for ci in range(c_in):
                            b[ky, in_lane(ci, wi),
                              base + wp:base + c_out * half:half] = w[:, ci, ky, kx]
    return b


def init_params(key):
    keys = jax.random.split(key, 6)
    c1, c2 = CONV_CHANNELS

    # Torch-layout weights, init mirroring VGG_SDN.initialize_weights.
    w1 = np.asarray(jax.random.normal(keys[0], (c1, 3, 3, 3), jnp.float32)) \
        * np.sqrt(2.0 / (9 * c1))
    w2 = np.asarray(jax.random.normal(keys[1], (c2, c1, 3, 3), jnp.float32)) \
        * np.sqrt(2.0 / (9 * c2))
    fc_in = (INPUT_SIZE // 4) ** 2 * c2                       # 4*4*16 = 256
    fc1_w = np.asarray(jax.random.normal(keys[2], (FC_LAYERS[0], fc_in),
                                         jnp.float32)) * 0.01
    wic = np.asarray(jax.random.normal(keys[3], (NUM_CLASSES, FC_LAYERS[0]),
                                       jnp.float32)) * 0.01
    we1 = np.asarray(jax.random.normal(keys[4], (FC_LAYERS[1], FC_LAYERS[0]),
                                       jnp.float32)) * 0.01
    we2 = np.asarray(jax.random.normal(keys[5], (NUM_CLASSES, FC_LAYERS[1]),
                                       jnp.float32)) * 0.01

    def bn_fold(c):
        # eval-mode BN with init params: gamma=1, beta=0, mean=0, var=1;
        # conv bias (zero-init) folded into the shift.
        gamma, beta = np.ones(c, np.float32), np.zeros(c, np.float32)
        mean, var = np.zeros(c, np.float32), np.ones(c, np.float32)
        conv_bias = np.zeros(c, np.float32)
        scale = gamma / np.sqrt(var + BN_EPS)
        return scale, beta + (conv_bias - mean) * scale

    sc1, sh1 = bn_fold(c1)
    sc2, sh2 = bn_fold(c2)

    half1 = INPUT_SIZE // 2                                   # 8
    half2 = INPUT_SIZE // 4                                   # 4

    # Conv1 input lanes are (w, ci) NHWC-interleaved.
    b1 = _build_conv_banded(w1, INPUT_SIZE, lambda ci, wi: wi * 3 + ci)
    # Conv2 input lanes are (ci, wi) channel-major (= conv1's pooled output).
    b2 = _build_conv_banded(w2, INPUT_SIZE // 2,
                            lambda ci, wi: ci * (INPUT_SIZE // 2) + wi)

    # fc1: fold the PyTorch NCHW flatten (f = c*16 + h*4 + w) and the pooled
    # layout (row h, lane c*4 + w) into 4 per-row weight slabs.
    hw = INPUT_SIZE // 4                                      # 4
    w1h = np.zeros((hw, c2 * hw, FC_LAYERS[0]), np.float32)
    for h in range(hw):
        for co in range(c2):
            for wp in range(hw):
                w1h[h, co * hw + wp, :] = fc1_w[:, co * hw * hw + h * hw + wp]

    # Lane-dense padded output heads: IC weights in cols 0..9, final head in
    # cols 64..73; the (zero-init) biases share one padded bias row.
    wic_pad = np.zeros((FC_LAYERS[0], OUT_PAD), np.float32)
    wic_pad[:, :NUM_CLASSES] = wic.T
    we2_pad = np.zeros((FC_LAYERS[1], OUT_PAD), np.float32)
    we2_pad[:, FIN_COL:FIN_COL + NUM_CLASSES] = we2.T
    bout = np.zeros((1, OUT_PAD), np.float32)                 # bic / be2 = 0

    bf16, f32 = jnp.bfloat16, jnp.float32
    return dict(
        b1=jnp.asarray(b1, bf16),
        s1=jnp.asarray(np.tile(np.repeat(sc1, half1), 2).reshape(1, -1), f32),
        t1=jnp.asarray(np.tile(np.repeat(sh1, half1), 2).reshape(1, -1), f32),
        b2=jnp.asarray(b2, bf16),
        s2=jnp.asarray(np.tile(np.repeat(sc2, half2), 2).reshape(1, -1), f32),
        t2=jnp.asarray(np.tile(np.repeat(sh2, half2), 2).reshape(1, -1), f32),
        w1h=jnp.asarray(w1h, bf16),
        fb1=jnp.zeros((1, FC_LAYERS[0]), f32),
        wic=jnp.asarray(wic_pad, bf16),
        we1=jnp.asarray(we1.T, bf16),
        be1=jnp.zeros((1, FC_LAYERS[1]), f32),
        we2=jnp.asarray(we2_pad, bf16),
        bout=jnp.asarray(bout, f32),
    )


# -----------------------------------------------------------------------------
if __name__ == "__main__":
    key = jax.random.PRNGKey(0)
    pkey, xkey = jax.random.split(key)

    params = init_params(pkey)
    x = jax.random.normal(xkey, (2, 3, INPUT_SIZE, INPUT_SIZE), jnp.float32)

    forward = jax.jit(vgg_sdn_forward)
    outs = forward(x, params)
    outs = jax.block_until_ready(outs)

    ic_out = outs[0][0]
    final_out = outs[1]
    assert ic_out.shape == (2, NUM_CLASSES), ic_out.shape
    assert final_out.shape == (2, NUM_CLASSES), final_out.shape
    assert bool(jnp.all(jnp.isfinite(ic_out)))
    assert bool(jnp.all(jnp.isfinite(final_out)))

    print("KERNEL_OK")
</pallas_src>

<mosaic_0001>
module attributes {stable_mosaic.version = 11 : i64} {
  func.func @vgg_sdn_kernel(%arg0: memref<2x18x48xf32, #tpu.memory_space<vmem>>, %arg1: memref<3x48x128xbf16, #tpu.memory_space<vmem>>, %arg2: memref<1x128xf32, #tpu.memory_space<vmem>>, %arg3: memref<1x128xf32, #tpu.memory_space<vmem>>, %arg4: memref<3x64x128xbf16, #tpu.memory_space<vmem>>, %arg5: memref<1x128xf32, #tpu.memory_space<vmem>>, %arg6: memref<1x128xf32, #tpu.memory_space<vmem>>, %arg7: memref<4x64x32xbf16, #tpu.memory_space<vmem>>, %arg8: memref<1x32xf32, #tpu.memory_space<vmem>>, %arg9: memref<32x128xbf16, #tpu.memory_space<vmem>>, %arg10: memref<32x32xbf16, #tpu.memory_space<vmem>>, %arg11: memref<1x32xf32, #tpu.memory_space<vmem>>, %arg12: memref<32x128xbf16, #tpu.memory_space<vmem>>, %arg13: memref<1x128xf32, #tpu.memory_space<vmem>>, %arg14: memref<2x128xf32, #tpu.memory_space<vmem>>, %arg15: memref<2x10x64xf32, #tpu.memory_space<vmem>>) attributes {dimension_semantics = [], scalar_prefetch = 0 : i64, scratch_operands = 1 : i64, tpu.core_type = #tpu.core_type<tc>} {
    %c0 = arith.constant 0 : index
    %c0_0 = arith.constant 0 : index
    %0 = vector.load %arg2[%c0, %c0_0] : memref<1x128xf32, #tpu.memory_space<vmem>>, vector<1x128xf32>
    %c0_1 = arith.constant 0 : index
    %c0_2 = arith.constant 0 : index
    %1 = vector.load %arg3[%c0_1, %c0_2] : memref<1x128xf32, #tpu.memory_space<vmem>>, vector<1x128xf32>
    %cst = arith.constant 0.000000e+00 : f32
    %2 = vector.broadcast %cst : f32 to vector<32x128xf32>
    %c0_3 = arith.constant 0 : index
    %c0_4 = arith.constant 0 : index
    %c0_5 = arith.constant 0 : index
    %3 = vector.load %arg0[%c0_3, %c0_4, %c0_5] : memref<2x18x48xf32, #tpu.memory_space<vmem>>, vector<2x16x48xf32>
    %4 = vector.shape_cast %3 : vector<2x16x48xf32> to vector<32x48xf32>
    %5 = arith.truncf %4 : vector<32x48xf32> to vector<32x48xbf16>
    %c0_6 = arith.constant 0 : index
    %c0_7 = arith.constant 0 : index
    %c0_8 = arith.constant 0 : index
    %6 = vector.load %arg1[%c0_6, %c0_7, %c0_8] : memref<3x48x128xbf16, #tpu.memory_space<vmem>>, vector<1x48x128xbf16>
    %7 = vector.shape_cast %6 : vector<1x48x128xbf16> to vector<48x128xbf16>
    %cst_9 = arith.constant dense<0.000000e+00> : vector<32x128xf32>
    %8 = tpu.matmul %5, %7, %cst_9 {dimension_numbers = #tpu.dot_dimension_numbers<[1], [0], [0], [1], [0, 0, 1, 1], [], []>} : vector<32x48xbf16>, vector<48x128xbf16>, vector<32x128xf32> -> vector<32x128xf32>
    %9 = arith.addf %2, %8 : vector<32x128xf32>
    %c0_10 = arith.constant 0 : index
    %c1 = arith.constant 1 : index
    %c0_11 = arith.constant 0 : index
    %10 = vector.load %arg0[%c0_10, %c1, %c0_11] : memref<2x18x48xf32, #tpu.memory_space<vmem>>, vector<2x16x48xf32>
    %11 = vector.shape_cast %10 : vector<2x16x48xf32> to vector<32x48xf32>
    %12 = arith.truncf %11 : vector<32x48xf32> to vector<32x48xbf16>
    %c1_12 = arith.constant 1 : index
    %c0_13 = arith.constant 0 : index
    %c0_14 = arith.constant 0 : index
    %13 = vector.load %arg1[%c1_12, %c0_13, %c0_14] : memref<3x48x128xbf16, #tpu.memory_space<vmem>>, vector<1x48x128xbf16>
    %14 = vector.shape_cast %13 : vector<1x48x128xbf16> to vector<48x128xbf16>
    %cst_15 = arith.constant dense<0.000000e+00> : vector<32x128xf32>
    %15 = tpu.matmul %12, %14, %cst_15 {dimension_numbers = #tpu.dot_dimension_numbers<[1], [0], [0], [1], [0, 0, 1, 1], [], []>} : vector<32x48xbf16>, vector<48x128xbf16>, vector<32x128xf32> -> vector<32x128xf32>
    %16 = arith.addf %9, %15 : vector<32x128xf32>
    %c0_16 = arith.constant 0 : index
    %c2 = arith.constant 2 : index
    %c0_17 = arith.constant 0 : index
    %17 = vector.load %arg0[%c0_16, %c2, %c0_17] : memref<2x18x48xf32, #tpu.memory_space<vmem>>, vector<2x16x48xf32>
    %18 = vector.shape_cast %17 : vector<2x16x48xf32> to vector<32x48xf32>
    %19 = arith.truncf %18 : vector<32x48xf32> to vector<32x48xbf16>
    %c2_18 = arith.constant 2 : index
    %c0_19 = arith.constant 0 : index
    %c0_20 = arith.constant 0 : index
    %20 = vector.load %arg1[%c2_18, %c0_19, %c0_20] : memref<3x48x128xbf16, #tpu.memory_space<vmem>>, vector<1x48x128xbf16>
    %21 = vector.shape_cast %20 : vector<1x48x128xbf16> to vector<48x128xbf16>
    %cst_21 = arith.constant dense<0.000000e+00> : vector<32x128xf32>
    %22 = tpu.matmul %19, %21, %cst_21 {dimension_numbers = #tpu.dot_dimension_numbers<[1], [0], [0], [1], [0, 0, 1, 1], [], []>} : vector<32x48xbf16>, vector<48x128xbf16>, vector<32x128xf32> -> vector<32x128xf32>
    %23 = arith.addf %16, %22 : vector<32x128xf32>
    %24 = vector.broadcast %0 : vector<1x128xf32> to vector<32x128xf32>
    %25 = arith.mulf %23, %24 : vector<32x128xf32>
    %26 = vector.broadcast %1 : vector<1x128xf32> to vector<32x128xf32>
    %27 = arith.addf %25, %26 : vector<32x128xf32>
    %cst_22 = arith.constant 0.000000e+00 : f32
    %28 = vector.broadcast %cst_22 : f32 to vector<32x128xf32>
    %29 = arith.maximumf %27, %28 : vector<32x128xf32>
    %c64_i32 = arith.constant 64 : i32
    %30 = tpu.dynamic_rotate %29 by %c64_i32 dim 1 : vector<32x128xf32>, i32 -> vector<32x128xf32>
    %31 = arith.maximumf %29, %30 : vector<32x128xf32>
    %32 = vector.extract_strided_slice %31 {offsets = [0, 0], sizes = [32, 64], strides = [1, 1]} : vector<32x128xf32> to vector<32x64xf32>
    %33 = vector.shape_cast %32 : vector<32x64xf32> to vector<16x2x64xf32>
    %34 = vector.extract_strided_slice %33 {offsets = [0, 0, 0], sizes = [16, 1, 64], strides = [1, 1, 1]} : vector<16x2x64xf32> to vector<16x1x64xf32>
    %35 = vector.shape_cast %34 : vector<16x1x64xf32> to vector<16x64xf32>
    %36 = vector.extract_strided_slice %33 {offsets = [0, 1, 0], sizes = [16, 1, 64], strides = [1, 1, 1]} : vector<16x2x64xf32> to vector<16x1x64xf32>
    %37 = vector.shape_cast %36 : vector<16x1x64xf32> to vector<16x64xf32>
    %38 = arith.maximumf %35, %37 : vector<16x64xf32>
    %cst_23 = arith.constant 0.000000e+00 : f32
    %39 = vector.broadcast %cst_23 : f32 to vector<2x1x64xf32>
    %c0_24 = arith.constant 0 : index
    %c0_25 = arith.constant 0 : index
    %c0_26 = arith.constant 0 : index
    %40 = vector.load %arg15[%c0_24, %c0_25, %c0_26] : memref<2x10x64xf32, #tpu.memory_space<vmem>>, vector<2x1x64xf32>
    tpu.vector_store %arg15[%c0_24, %c0_25, %c0_26], %39 {strides = array<i32>} : memref<2x10x64xf32, #tpu.memory_space<vmem>>, vector<2x1x64xf32>,
    %cst_27 = arith.constant 0.000000e+00 : f32
    %41 = vector.broadcast %cst_27 : f32 to vector<2x1x64xf32>
    %c0_28 = arith.constant 0 : index
    %c9 = arith.constant 9 : index
    %c0_29 = arith.constant 0 : index
    %42 = vector.load %arg15[%c0_28, %c9, %c0_29] : memref<2x10x64xf32, #tpu.memory_space<vmem>>, vector<2x1x64xf32>
    tpu.vector_store %arg15[%c0_28, %c9, %c0_29], %41 {strides = array<i32>} : memref<2x10x64xf32, #tpu.memory_space<vmem>>, vector<2x1x64xf32>,
    %43 = vector.shape_cast %38 : vector<16x64xf32> to vector<2x8x64xf32>
    %c0_30 = arith.constant 0 : index
    %c1_31 = arith.constant 1 : index
    %c0_32 = arith.constant 0 : index
    %44 = vector.load %arg15[%c0_30, %c1_31, %c0_32] : memref<2x10x64xf32, #tpu.memory_space<vmem>>, vector<2x8x64xf32>
    tpu.vector_store %arg15[%c0_30, %c1_31, %c0_32], %43 {strides = array<i32>} : memref<2x10x64xf32, #tpu.memory_space<vmem>>, vector<2x8x64xf32>,
    %c0_33 = arith.constant 0 : index
    %c0_34 = arith.constant 0 : index
    %45 = vector.load %arg5[%c0_33, %c0_34] : memref<1x128xf32, #tpu.memory_space<vmem>>, vector<1x128xf32>
    %c0_35 = arith.constant 0 : index
    %c0_36 = arith.constant 0 : index
    %46 = vector.load %arg6[%c0_35, %c0_36] : memref<1x128xf32, #tpu.memory_space<vmem>>, vector<1x128xf32>
    %cst_37 = arith.constant 0.000000e+00 : f32
    %47 = vector.broadcast %cst_37 : f32 to vector<16x128xf32>
    %c0_38 = arith.constant 0 : index
    %c0_39 = arith.constant 0 : index
    %c0_40 = arith.constant 0 : index
    %48 = vector.load %arg15[%c0_38, %c0_39, %c0_40] : memref<2x10x64xf32, #tpu.memory_space<vmem>>, vector<2x8x64xf32>
    %49 = vector.shape_cast %48 : vector<2x8x64xf32> to vector<16x64xf32>
    %50 = arith.truncf %49 : vector<16x64xf32> to vector<16x64xbf16>
    %c0_41 = arith.constant 0 : index
    %c0_42 = arith.constant 0 : index
    %c0_43 = arith.constant 0 : index
    %51 = vector.load %arg4[%c0_41, %c0_42, %c0_43] : memref<3x64x128xbf16, #tpu.memory_space<vmem>>, vector<1x64x128xbf16>
    %52 = vector.shape_cast %51 : vector<1x64x128xbf16> to vector<64x128xbf16>
    %cst_44 = arith.constant dense<0.000000e+00> : vector<16x128xf32>
    %53 = tpu.matmul %50, %52, %cst_44 {dimension_numbers = #tpu.dot_dimension_numbers<[1], [0], [0], [1], [0, 0, 1, 1], [], []>} : vector<16x64xbf16>, vector<64x128xbf16>, vector<16x128xf32> -> vector<16x128xf32>
    %54 = arith.addf %47, %53 : vector<16x128xf32>
    %c0_45 = arith.constant 0 : index
    %c1_46 = arith.constant 1 : index
    %c0_47 = arith.constant 0 : index
    %55 = vector.load %arg15[%c0_45, %c1_46, %c0_47] : memref<2x10x64xf32, #tpu.memory_space<vmem>>, vector<2x8x64xf32>
    %56 = vector.shape_cast %55 : vector<2x8x64xf32> to vector<16x64xf32>
    %57 = arith.truncf %56 : vector<16x64xf32> to vector<16x64xbf16>
    %c1_48 = arith.constant 1 : index
    %c0_49 = arith.constant 0 : index
    %c0_50 = arith.constant 0 : index
    %58 = vector.load %arg4[%c1_48, %c0_49, %c0_50] : memref<3x64x128xbf16, #tpu.memory_space<vmem>>, vector<1x64x128xbf16>
    %59 = vector.shape_cast %58 : vector<1x64x128xbf16> to vector<64x128xbf16>
    %cst_51 = arith.constant dense<0.000000e+00> : vector<16x128xf32>
    %60 = tpu.matmul %57, %59, %cst_51 {dimension_numbers = #tpu.dot_dimension_numbers<[1], [0], [0], [1], [0, 0, 1, 1], [], []>} : vector<16x64xbf16>, vector<64x128xbf16>, vector<16x128xf32> -> vector<16x128xf32>
    %61 = arith.addf %54, %60 : vector<16x128xf32>
    %c0_52 = arith.constant 0 : index
    %c2_53 = arith.constant 2 : index
    %c0_54 = arith.constant 0 : index
    %62 = vector.load %arg15[%c0_52, %c2_53, %c0_54] : memref<2x10x64xf32, #tpu.memory_space<vmem>>, vector<2x8x64xf32>
    %63 = vector.shape_cast %62 : vector<2x8x64xf32> to vector<16x64xf32>
    %64 = arith.truncf %63 : vector<16x64xf32> to vector<16x64xbf16>
    %c2_55 = arith.constant 2 : index
    %c0_56 = arith.constant 0 : index
    %c0_57 = arith.constant 0 : index
    %65 = vector.load %arg4[%c2_55, %c0_56, %c0_57] : memref<3x64x128xbf16, #tpu.memory_space<vmem>>, vector<1x64x128xbf16>
    %66 = vector.shape_cast %65 : vector<1x64x128xbf16> to vector<64x128xbf16>
    %cst_58 = arith.constant dense<0.000000e+00> : vector<16x128xf32>
    %67 = tpu.matmul %64, %66, %cst_58 {dimension_numbers = #tpu.dot_dimension_numbers<[1], [0], [0], [1], [0, 0, 1, 1], [], []>} : vector<16x64xbf16>, vector<64x128xbf16>, vector<16x128xf32> -> vector<16x128xf32>
    %68 = arith.addf %61, %67 : vector<16x128xf32>
    %69 = vector.broadcast %45 : vector<1x128xf32> to vector<16x128xf32>
    %70 = arith.mulf %68, %69 : vector<16x128xf32>
    %71 = vector.broadcast %46 : vector<1x128xf32> to vector<16x128xf32>
    %72 = arith.addf %70, %71 : vector<16x128xf32>
    %cst_59 = arith.constant 0.000000e+00 : f32
    %73 = vector.broadcast %cst_59 : f32 to vector<16x128xf32>
    %74 = arith.maximumf %72, %73 : vector<16x128xf32>
    %c64_i32_60 = arith.constant 64 : i32
    %75 = tpu.dynamic_rotate %74 by %c64_i32_60 dim 1 : vector<16x128xf32>, i32 -> vector<16x128xf32>
    %76 = arith.maximumf %74, %75 : vector<16x128xf32>
    %77 = vector.extract_strided_slice %76 {offsets = [0, 0], sizes = [16, 64], strides = [1, 1]} : vector<16x128xf32> to vector<16x64xf32>
    %78 = vector.shape_cast %77 : vector<16x64xf32> to vector<8x2x64xf32>
    %79 = vector.extract_strided_slice %78 {offsets = [0, 0, 0], sizes = [8, 1, 64], strides = [1, 1, 1]} : vector<8x2x64xf32> to vector<8x1x64xf32>
    %80 = vector.shape_cast %79 : vector<8x1x64xf32> to vector<8x64xf32>
    %81 = vector.extract_strided_slice %78 {offsets = [0, 1, 0], sizes = [8, 1, 64], strides = [1, 1, 1]} : vector<8x2x64xf32> to vector<8x1x64xf32>
    %82 = vector.shape_cast %81 : vector<8x1x64xf32> to vector<8x64xf32>
    %83 = arith.maximumf %80, %82 : vector<8x64xf32>
    %84 = vector.shape_cast %83 : vector<8x64xf32> to vector<2x4x64xf32>
    %85 = arith.truncf %84 : vector<2x4x64xf32> to vector<2x4x64xbf16>
    %cst_61 = arith.constant 0.000000e+00 : f32
    %86 = vector.broadcast %cst_61 : f32 to vector<2x32xf32>
    %87 = vector.extract_strided_slice %85 {offsets = [0, 0, 0], sizes = [2, 1, 64], strides = [1, 1, 1]} : vector<2x4x64xbf16> to vector<2x1x64xbf16>
    %88 = vector.shape_cast %87 : vector<2x1x64xbf16> to vector<2x64xbf16>
    %c0_62 = arith.constant 0 : index
    %c0_63 = arith.constant 0 : index
    %c0_64 = arith.constant 0 : index
    %89 = vector.load %arg7[%c0_62, %c0_63, %c0_64] : memref<4x64x32xbf16, #tpu.memory_space<vmem>>, vector<1x64x32xbf16>
    %90 = vector.shape_cast %89 : vector<1x64x32xbf16> to vector<64x32xbf16>
    %cst_65 = arith.constant dense<0.000000e+00> : vector<2x32xf32>
    %91 = tpu.matmul %88, %90, %cst_65 {dimension_numbers = #tpu.dot_dimension_numbers<[1], [0], [0], [1], [0, 0, 1, 1], [], []>} : vector<2x64xbf16>, vector<64x32xbf16>, vector<2x32xf32> -> vector<2x32xf32>
    %92 = arith.addf %86, %91 : vector<2x32xf32>
    %93 = vector.extract_strided_slice %85 {offsets = [0, 1, 0], sizes = [2, 1, 64], strides = [1, 1, 1]} : vector<2x4x64xbf16> to vector<2x1x64xbf16>
    %94 = vector.shape_cast %93 : vector<2x1x64xbf16> to vector<2x64xbf16>
    %c1_66 = arith.constant 1 : index
    %c0_67 = arith.constant 0 : index
    %c0_68 = arith.constant 0 : index
    %95 = vector.load %arg7[%c1_66, %c0_67, %c0_68] : memref<4x64x32xbf16, #tpu.memory_space<vmem>>, vector<1x64x32xbf16>
    %96 = vector.shape_cast %95 : vector<1x64x32xbf16> to vector<64x32xbf16>
    %cst_69 = arith.constant dense<0.000000e+00> : vector<2x32xf32>
    %97 = tpu.matmul %94, %96, %cst_69 {dimension_numbers = #tpu.dot_dimension_numbers<[1], [0], [0], [1], [0, 0, 1, 1], [], []>} : vector<2x64xbf16>, vector<64x32xbf16>, vector<2x32xf32> -> vector<2x32xf32>
    %98 = arith.addf %92, %97 : vector<2x32xf32>
    %99 = vector.extract_strided_slice %85 {offsets = [0, 2, 0], sizes = [2, 1, 64], strides = [1, 1, 1]} : vector<2x4x64xbf16> to vector<2x1x64xbf16>
    %100 = vector.shape_cast %99 : vector<2x1x64xbf16> to vector<2x64xbf16>
    %c2_70 = arith.constant 2 : index
    %c0_71 = arith.constant 0 : index
    %c0_72 = arith.constant 0 : index
    %101 = vector.load %arg7[%c2_70, %c0_71, %c0_72] : memref<4x64x32xbf16, #tpu.memory_space<vmem>>, vector<1x64x32xbf16>
    %102 = vector.shape_cast %101 : vector<1x64x32xbf16> to vector<64x32xbf16>
    %cst_73 = arith.constant dense<0.000000e+00> : vector<2x32xf32>
    %103 = tpu.matmul %100, %102, %cst_73 {dimension_numbers = #tpu.dot_dimension_numbers<[1], [0], [0], [1], [0, 0, 1, 1], [], []>} : vector<2x64xbf16>, vector<64x32xbf16>, vector<2x32xf32> -> vector<2x32xf32>
    %104 = arith.addf %98, %103 : vector<2x32xf32>
    %105 = vector.extract_strided_slice %85 {offsets = [0, 3, 0], sizes = [2, 1, 64], strides = [1, 1, 1]} : vector<2x4x64xbf16> to vector<2x1x64xbf16>
    %106 = vector.shape_cast %105 : vector<2x1x64xbf16> to vector<2x64xbf16>
    %c3 = arith.constant 3 : index
    %c0_74 = arith.constant 0 : index
    %c0_75 = arith.constant 0 : index
    %107 = vector.load %arg7[%c3, %c0_74, %c0_75] : memref<4x64x32xbf16, #tpu.memory_space<vmem>>, vector<1x64x32xbf16>
    %108 = vector.shape_cast %107 : vector<1x64x32xbf16> to vector<64x32xbf16>
    %cst_76 = arith.constant dense<0.000000e+00> : vector<2x32xf32>
    %109 = tpu.matmul %106, %108, %cst_76 {dimension_numbers = #tpu.dot_dimension_numbers<[1], [0], [0], [1], [0, 0, 1, 1], [], []>} : vector<2x64xbf16>, vector<64x32xbf16>, vector<2x32xf32> -> vector<2x32xf32>
    %110 = arith.addf %104, %109 : vector<2x32xf32>
    %c0_77 = arith.constant 0 : index
    %c0_78 = arith.constant 0 : index
    %111 = vector.load %arg8[%c0_77, %c0_78] : memref<1x32xf32, #tpu.memory_space<vmem>>, vector<1x32xf32>
    %112 = vector.broadcast %111 : vector<1x32xf32> to vector<2x32xf32>
    %113 = arith.addf %110, %112 : vector<2x32xf32>
    %cst_79 = arith.constant 0.000000e+00 : f32
    %114 = vector.broadcast %cst_79 : f32 to vector<2x32xf32>
    %115 = arith.maximumf %113, %114 : vector<2x32xf32>
    %116 = arith.truncf %115 : vector<2x32xf32> to vector<2x32xbf16>
    %c0_80 = arith.constant 0 : index
    %c0_81 = arith.constant 0 : index
    %117 = vector.load %arg10[%c0_80, %c0_81] : memref<32x32xbf16, #tpu.memory_space<vmem>>, vector<32x32xbf16>
    %cst_82 = arith.constant dense<0.000000e+00> : vector<2x32xf32>
    %118 = tpu.matmul %116, %117, %cst_82 {dimension_numbers = #tpu.dot_dimension_numbers<[1], [0], [0], [1], [0, 0, 1, 1], [], []>} : vector<2x32xbf16>, vector<32x32xbf16>, vector<2x32xf32> -> vector<2x32xf32>
    %c0_83 = arith.constant 0 : index
    %c0_84 = arith.constant 0 : index
    %119 = vector.load %arg11[%c0_83, %c0_84] : memref<1x32xf32, #tpu.memory_space<vmem>>, vector<1x32xf32>
    %120 = vector.broadcast %119 : vector<1x32xf32> to vector<2x32xf32>
    %121 = arith.addf %118, %120 : vector<2x32xf32>
    %c0_85 = arith.constant 0 : index
    %c0_86 = arith.constant 0 : index
    %122 = vector.load %arg9[%c0_85, %c0_86] : memref<32x128xbf16, #tpu.memory_space<vmem>>, vector<32x128xbf16>
    %cst_87 = arith.constant dense<0.000000e+00> : vector<2x128xf32>
    %123 = tpu.matmul %116, %122, %cst_87 {dimension_numbers = #tpu.dot_dimension_numbers<[1], [0], [0], [1], [0, 0, 1, 1], [], []>} : vector<2x32xbf16>, vector<32x128xbf16>, vector<2x128xf32> -> vector<2x128xf32>
    %124 = arith.truncf %121 : vector<2x32xf32> to vector<2x32xbf16>
    %c0_88 = arith.constant 0 : index
    %c0_89 = arith.constant 0 : index
    %125 = vector.load %arg12[%c0_88, %c0_89] : memref<32x128xbf16, #tpu.memory_space<vmem>>, vector<32x128xbf16>
    %cst_90 = arith.constant dense<0.000000e+00> : vector<2x128xf32>
    %126 = tpu.matmul %124, %125, %cst_90 {dimension_numbers = #tpu.dot_dimension_numbers<[1], [0], [0], [1], [0, 0, 1, 1], [], []>} : vector<2x32xbf16>, vector<32x128xbf16>, vector<2x128xf32> -> vector<2x128xf32>
    %127 = arith.addf %123, %126 : vector<2x128xf32>
    %c0_91 = arith.constant 0 : index
    %c0_92 = arith.constant 0 : index
    %128 = vector.load %arg13[%c0_91, %c0_92] : memref<1x128xf32, #tpu.memory_space<vmem>>, vector<1x128xf32>
    %129 = vector.broadcast %128 : vector<1x128xf32> to vector<2x128xf32>
    %130 = arith.addf %127, %129 : vector<2x128xf32>
    %c0_93 = arith.constant 0 : index
    %c0_94 = arith.constant 0 : index
    %131 = vector.load %arg14[%c0_93, %c0_94] : memref<2x128xf32, #tpu.memory_space<vmem>>, vector<2x128xf32>
    tpu.vector_store %arg14[%c0_93, %c0_94], %130 {strides = array<i32>} : memref<2x128xf32, #tpu.memory_space<vmem>>, vector<2x128xf32>,
    return
  }
}

</mosaic_0001>

<llo_original>
// kernel: vgg_sdn_forward.1
$region0: #{vgg_sdn_forward.1}
  #allocation0 [shape = 'u32[]', space=smem, size = 0x4, offset = 0x4, fixed_abs, tag = 'smem constant byte address 0x4 - core index']
  #allocation1 [shape = 'u32[144,128]{1,0:T(1,128)}', space=vmem, size = 0x12000, scoped, tag = 'internal scratch']
  #allocation2 [shape = 'f32[2,10,64]{2,1,0:T(8,128)}', space=vmem, size = 0x4000, scoped, tag = 'scratch operand']
  %s0 = inlined_call_operand.vmem [shape: f32[2,18,48], index: 0, kind: input, shape index: {}]
  %s1 = inlined_call_operand.vmem [shape: bf16[3,48,128], index: 1, kind: input, shape index: {}]
  %s2 = inlined_call_operand.vmem [shape: f32[1,128], index: 2, kind: input, shape index: {}]
  %s3 = inlined_call_operand.vmem [shape: f32[1,128], index: 3, kind: input, shape index: {}]
  %s4 = inlined_call_operand.vmem [shape: bf16[3,64,128], index: 4, kind: input, shape index: {}]
  %s5 = inlined_call_operand.vmem [shape: f32[1,128], index: 5, kind: input, shape index: {}]
  %s6 = inlined_call_operand.vmem [shape: f32[1,128], index: 6, kind: input, shape index: {}]
  %s7 = inlined_call_operand.vmem [shape: bf16[4,64,32], index: 7, kind: input, shape index: {}]
  %s8 = inlined_call_operand.vmem [shape: f32[1,32], index: 8, kind: input, shape index: {}]
  %s9 = inlined_call_operand.vmem [shape: bf16[32,128], index: 9, kind: input, shape index: {}]
  %s10 = inlined_call_operand.vmem [shape: bf16[32,32], index: 10, kind: input, shape index: {}]
  %s11 = inlined_call_operand.vmem [shape: f32[1,32], index: 11, kind: input, shape index: {}]
  %s12 = inlined_call_operand.vmem [shape: bf16[32,128], index: 12, kind: input, shape index: {}]
  %s13 = inlined_call_operand.vmem [shape: f32[1,128], index: 13, kind: input, shape index: {}]
  %s14 = inlined_call_operand.vmem [shape: f32[2,128], index: 14, kind: output, shape index: {}]
  %s15 = sld [smem:[#allocation0]]
  $region66: #{vgg_sdn_forward.1} parent=0
    _
  %s17 = ssub.s32 1, %s15
  %s18 = scalar_select 0, %s17, %s15
  // Predicated region
  $region2: #{vgg_sdn_forward.1} parent=0 // pred_check
    _
  $region3: #{vgg_sdn_forward.1} parent=0 // pred_check_branch
    %20 = sbr.rel (0) target = $region5
  $region4: #{vgg_sdn_forward.1} parent=0 // pred_region
    _
  $region5: #{vgg_sdn_forward.1} parent=0 // pred_fallthru
    _
  // Predicated region
  $region6: #{vgg_sdn_forward.1} parent=0 // pred_check
    _
  $region7: #{vgg_sdn_forward.1} parent=0 // pred_check_branch
    %22 = sbr.rel (0) target = $region9
  $region8: #{vgg_sdn_forward.1} parent=0 // pred_region
    _
  $region9: #{vgg_sdn_forward.1} parent=0 // pred_fallthru
    _
  // Predicated region
  $region10: #{vgg_sdn_forward.1} parent=0 // pred_check
    _
  $region11: #{vgg_sdn_forward.1} parent=0 // pred_check_branch
    %24 = sbr.rel (0) target = $region13
  $region12: #{vgg_sdn_forward.1} parent=0 // pred_region
    _
  $region13: #{vgg_sdn_forward.1} parent=0 // pred_fallthru
    _
  // Predicated region
  $region14: #{vgg_sdn_forward.1} parent=0 // pred_check
    _
  $region15: #{vgg_sdn_forward.1} parent=0 // pred_check_branch
    %26 = sbr.rel (0) target = $region17
  $region16: #{vgg_sdn_forward.1} parent=0 // pred_region
    _
  $region17: #{vgg_sdn_forward.1} parent=0 // pred_fallthru
    _
  // Predicated region
  $region18: #{vgg_sdn_forward.1} parent=0 // pred_check
    _
  $region19: #{vgg_sdn_forward.1} parent=0 // pred_check_branch
    %28 = sbr.rel (0) target = $region21
  $region20: #{vgg_sdn_forward.1} parent=0 // pred_region
    _
  $region21: #{vgg_sdn_forward.1} parent=0 // pred_fallthru
    _
  // Predicated region
  $region22: #{vgg_sdn_forward.1} parent=0 // pred_check
    _
  $region23: #{vgg_sdn_forward.1} parent=0 // pred_check_branch
    %30 = sbr.rel (0) target = $region25
  $region24: #{vgg_sdn_forward.1} parent=0 // pred_region
    _
  $region25: #{vgg_sdn_forward.1} parent=0 // pred_fallthru
    _
  // Predicated region
  $region26: #{vgg_sdn_forward.1} parent=0 // pred_check
    _
  $region27: #{vgg_sdn_forward.1} parent=0 // pred_check_branch
    %32 = sbr.rel (0) target = $region29
  $region28: #{vgg_sdn_forward.1} parent=0 // pred_region
    _
  $region29: #{vgg_sdn_forward.1} parent=0 // pred_fallthru
    _
  // Predicated region
  $region30: #{vgg_sdn_forward.1} parent=0 // pred_check
    _
  $region31: #{vgg_sdn_forward.1} parent=0 // pred_check_branch
    %34 = sbr.rel (0) target = $region33
  $region32: #{vgg_sdn_forward.1} parent=0 // pred_region
    _
  $region33: #{vgg_sdn_forward.1} parent=0 // pred_fallthru
    _
  // Predicated region
  $region34: #{vgg_sdn_forward.1} parent=0 // pred_check
    _
  $region35: #{vgg_sdn_forward.1} parent=0 // pred_check_branch
    %36 = sbr.rel (0) target = $region37
  $region36: #{vgg_sdn_forward.1} parent=0 // pred_region
    _
  $region37: #{vgg_sdn_forward.1} parent=0 // pred_fallthru
    _
  // Predicated region
  $region38: #{vgg_sdn_forward.1} parent=0 // pred_check
    _
  $region39: #{vgg_sdn_forward.1} parent=0 // pred_check_branch
    %38 = sbr.rel (0) target = $region41
  $region40: #{vgg_sdn_forward.1} parent=0 // pred_region
    _
  $region41: #{vgg_sdn_forward.1} parent=0 // pred_fallthru
    _
  // Predicated region
  $region42: #{vgg_sdn_forward.1} parent=0 // pred_check
    _
  $region43: #{vgg_sdn_forward.1} parent=0 // pred_check_branch
    %40 = sbr.rel (0) target = $region45
  $region44: #{vgg_sdn_forward.1} parent=0 // pred_region
    _
  $region45: #{vgg_sdn_forward.1} parent=0 // pred_fallthru
    _
  // Predicated region
  $region46: #{vgg_sdn_forward.1} parent=0 // pred_check
    _
  $region47: #{vgg_sdn_forward.1} parent=0 // pred_check_branch
    %42 = sbr.rel (0) target = $region49
  $region48: #{vgg_sdn_forward.1} parent=0 // pred_region
    _
  $region49: #{vgg_sdn_forward.1} parent=0 // pred_fallthru
    _
  // Predicated region
  $region50: #{vgg_sdn_forward.1} parent=0 // pred_check
    _
  $region51: #{vgg_sdn_forward.1} parent=0 // pred_check_branch
    %44 = sbr.rel (0) target = $region53
  $region52: #{vgg_sdn_forward.1} parent=0 // pred_region
    _
  $region53: #{vgg_sdn_forward.1} parent=0 // pred_fallthru
    _
  // Predicated region
  $region54: #{vgg_sdn_forward.1} parent=0 // pred_check
    _
  $region55: #{vgg_sdn_forward.1} parent=0 // pred_check_branch
    %46 = sbr.rel (0) target = $region57
  $region56: #{vgg_sdn_forward.1} parent=0 // pred_region
    _
  $region57: #{vgg_sdn_forward.1} parent=0 // pred_fallthru
    _
  %v48 = vld [vmem:[%s2] sm:$0x1]
  %v49 = vld [vmem:[%s3] sm:$0x1]
  %v50 = vld [vmem:[%s0] sm:$0xff]
  %v51 = vld [vmem:[%s0 + $0x8] sm:$0xff]
  %v52 = vld [vmem:[%s0 + $0x18] sm:$0xff]
  %v53 = vld [vmem:[%s0 + $0x20] sm:$0xff]
  %v54 = vpack.c.bf16 %v51, %v50
  %v55 = vpack.c.bf16 %v53, %v52
  %v56 = vld [vmem:[%s1] sm:$0xf]
  %v57 = vld [vmem:[%s1 + $0x4] sm:$0xf]
  %v58 = vld [vmem:[%s1 + $0x8] sm:$0xf]
  %v59 = vld [vmem:[%s1 + $0xc] sm:$0xf]
  %v60 = vld [vmem:[%s1 + $0x10] sm:$0xf]
  %v61 = vld [vmem:[%s1 + $0x14] sm:$0xf]
  %v62 = vld [vmem:[%s0 + $0x1] sm:$0xff]
  %v63 = vld [vmem:[%s0 + $0x9] sm:$0xff]
  %v64 = vld [vmem:[%s0 + $0x19] sm:$0xff]
  %v65 = vld [vmem:[%s0 + $0x21] sm:$0xff]
  %v66 = vpack.c.bf16 %v63, %v62
  %v67 = vpack.c.bf16 %v65, %v64
  %s68 = scalar_lea.vmem %s1, 24
  %v69 = vld [vmem:[%s68] sm:$0xf]
  %v70 = vld [vmem:[%s68 + $0x4] sm:$0xf]
  %v71 = vld [vmem:[%s68 + $0x8] sm:$0xf]
  %v72 = vld [vmem:[%s68 + $0xc] sm:$0xf]
  %v73 = vld [vmem:[%s68 + $0x10] sm:$0xf]
  %v74 = vld [vmem:[%s68 + $0x14] sm:$0xf]
  %v81 = vunpack.c.l.b16 %v69
  %v82 = vunpack.c.l.b16 %v70
  %v83 = vunpack.c.l.b16 %v71
  %v84 = vunpack.c.l.b16 %v72
  %v85 = vunpack.c.l.b16 %v73
  %v86 = vunpack.c.l.b16 %v74
  %v87 = vpack.c.b16 %v82, %v81
  %v88 = vpack.c.b16 %v84, %v83
  %v89 = vpack.c.b16 %v86, %v85
  %vm93 = vcmask 392192
  %v95 = vsel %vm93, %v66, 0
  %v98 = vsel %vm93, %v67, 0
  %100 = vmatprep.subr.bf16.mxu0 0
  %101 = vmatpush1.bf16.msra.mxu0 %v87
  %102 = vmatprep.subr.bf16.mxu0 0
  %103 = vmatpush1.bf16.msra.mxu0 %v88
  %104 = vmatprep.subr.bf16.mxu0 0
  %105 = vmatpush1.bf16.msra.mxu0 %v89
  %106 = vmatprep.subr.bf16.mxu0 0
  %107 = vmatpush1.bf16.msra.mxu0 0
  %108 = vmatprep.subr.bf16.mxu0 0
  %109 = vmatpush1.bf16.msra.mxu0 0
  %110 = vmatprep.subr.bf16.mxu0 0
  %111 = vmatpush1.bf16.msra.mxu0 0
  %112 = vmatprep.subr.bf16.mxu0 0
  %113 = vmatpush1.bf16.msra.mxu0 0
  %114 = vmatprep.subr.bf16.mxu0 0
  %115 = vmatpush1.bf16.msra.mxu0 0
  %116 = vmatprep.subr.bf16.mxu0 0
  %117 = vmatpush1.bf16.msra.mxu0 0
  %118 = vmatprep.subr.bf16.mxu0 0
  %119 = vmatpush1.bf16.msra.mxu0 0
  %120 = vmatprep.subr.bf16.mxu0 0
  %121 = vmatpush1.bf16.msra.mxu0 0
  %122 = vmatprep.subr.bf16.mxu0 0
  %123 = vmatpush1.bf16.msra.mxu0 0
  %124 = vmatprep.subr.bf16.mxu0 0
  %125 = vmatpush1.bf16.msra.mxu0 0
  %126 = vmatprep.subr.bf16.mxu0 0
  %127 = vmatpush1.bf16.msra.mxu0 0
  %128 = vmatprep.subr.bf16.mxu0 0
  %129 = vmatpush1.bf16.msra.mxu0 0
  %130 = vmatprep.subr.bf16.mxu0 0
  %131 = vmatpush1.bf16.msra.mxu0 0
  %132 = vmatprep.mubr.bf16.mxu0 0
  %133 = vmatmul.mubr.bf16.gmra.mrb[0].mxu0 %v95
  %v134 = vpop.f32.mrb[0].mxu0
  %v135 = vadd.f32 0.0, %v134
  %v136 = vpop.f32.mrb[0].mxu0
  %v137 = vpop.f32.mrb[0].mxu0
  %v138 = vadd.f32 0.0, %v137
  %v139 = vpop.f32.mrb[0].mxu0
  %140 = vmatprep.mubr.bf16.mxu0 0
  %141 = vmatmul.mubr.bf16.gmra.mrb[0].mxu0 %v98
  %v142 = vpop.f32.mrb[0].mxu0
  %v143 = vadd.f32 0.0, %v142
  %v144 = vpop.f32.mrb[0].mxu0
  %v145 = vpop.f32.mrb[0].mxu0
  %v146 = vadd.f32 0.0, %v145
  %v147 = vpop.f32.mrb[0].mxu0
  %148 = vdwg.mxu0
  %v155 = vunpack.c.l.b16 %v56
  %v156 = vunpack.c.l.b16 %v57
  %v157 = vunpack.c.l.b16 %v58
  %v158 = vunpack.c.l.b16 %v59
  %v159 = vunpack.c.l.b16 %v60
  %v160 = vunpack.c.l.b16 %v61
  %v161 = vpack.c.b16 %v156, %v155
  %v162 = vpack.c.b16 %v158, %v157
  %v163 = vpack.c.b16 %v160, %v159
  %v168 = vsel %vm93, %v54, 0
  %v171 = vsel %vm93, %v55, 0
  %173 = vmatprep.subr.bf16.mxu0 0
  %174 = vmatpush1.bf16.msra.mxu0 %v161
  %175 = vmatprep.subr.bf16.mxu0 0
  %176 = vmatpush1.bf16.msra.mxu0 %v162
  %177 = vmatprep.subr.bf16.mxu0 0
  %178 = vmatpush1.bf16.msra.mxu0 %v163
  %179 = vmatprep.subr.bf16.mxu0 0
  %180 = vmatpush1.bf16.msra.mxu0 0
  %181 = vmatprep.subr.bf16.mxu0 0
  %182 = vmatpush1.bf16.msra.mxu0 0
  %183 = vmatprep.subr.bf16.mxu0 0
  %184 = vmatpush1.bf16.msra.mxu0 0
  %185 = vmatprep.subr.bf16.mxu0 0
  %186 = vmatpush1.bf16.msra.mxu0 0
  %187 = vmatprep.subr.bf16.mxu0 0
  %188 = vmatpush1.bf16.msra.mxu0 0
  %189 = vmatprep.subr.bf16.mxu0 0
  %190 = vmatpush1.bf16.msra.mxu0 0
  %191 = vmatprep.subr.bf16.mxu0 0
  %192 = vmatpush1.bf16.msra.mxu0 0
  %193 = vmatprep.subr.bf16.mxu0 0
  %194 = vmatpush1.bf16.msra.mxu0 0
  %195 = vmatprep.subr.bf16.mxu0 0
  %196 = vmatpush1.bf16.msra.mxu0 0
  %197 = vmatprep.subr.bf16.mxu0 0
  %198 = vmatpush1.bf16.msra.mxu0 0
  %199 = vmatprep.subr.bf16.mxu0 0
  %200 = vmatpush1.bf16.msra.mxu0 0
  %201 = vmatprep.subr.bf16.mxu0 0
  %202 = vmatpush1.bf16.msra.mxu0 0
  %203 = vmatprep.subr.bf16.mxu0 0
  %204 = vmatpush1.bf16.msra.mxu0 0
  %205 = vmatprep.mubr.bf16.mxu0 0
  %206 = vmatmul.mubr.bf16.gmra.mrb[0].mxu0 %v168
  %v207 = vpop.f32.mrb[0].mxu0
  %v208 = vadd.f32 %v135, %v207
  %v209 = vpop.f32.mrb[0].mxu0
  %v210 = vpop.f32.mrb[0].mxu0
  %v211 = vadd.f32 %v138, %v210
  %v212 = vpop.f32.mrb[0].mxu0
  %213 = vmatprep.mubr.bf16.mxu0 0
  %214 = vmatmul.mubr.bf16.gmra.mrb[0].mxu0 %v171
  %v215 = vpop.f32.mrb[0].mxu0
  %v216 = vadd.f32 %v143, %v215
  %v217 = vpop.f32.mrb[0].mxu0
  %v218 = vpop.f32.mrb[0].mxu0
  %v219 = vadd.f32 %v146, %v218
  %v220 = vpop.f32.mrb[0].mxu0
  %221 = vdwg.mxu0
  %v222 = vld [vmem:[%s0 + $0x2] sm:$0xff]
  %v223 = vld [vmem:[%s0 + $0xa] sm:$0xff]
  %v224 = vld [vmem:[%s0 + $0x1a] sm:$0xff]
  %v225 = vld [vmem:[%s0 + $0x22] sm:$0xff]
  %v226 = vpack.c.bf16 %v223, %v222
  %v227 = vpack.c.bf16 %v225, %v224
  %s228 = scalar_lea.vmem %s1, 48
  %v229 = vld [vmem:[%s228] sm:$0xf]
  %v230 = vld [vmem:[%s228 + $0x4] sm:$0xf]
  %v231 = vld [vmem:[%s228 + $0x8] sm:$0xf]
  %v232 = vld [vmem:[%s228 + $0xc] sm:$0xf]
  %v233 = vld [vmem:[%s228 + $0x10] sm:$0xf]
  %v234 = vld [vmem:[%s228 + $0x14] sm:$0xf]
  %v241 = vunpack.c.l.b16 %v229
  %v242 = vunpack.c.l.b16 %v230
  %v243 = vunpack.c.l.b16 %v231
  %v244 = vunpack.c.l.b16 %v232
  %v245 = vunpack.c.l.b16 %v233
  %v246 = vunpack.c.l.b16 %v234
  %v247 = vpack.c.b16 %v242, %v241
  %v248 = vpack.c.b16 %v244, %v243
  %v249 = vpack.c.b16 %v246, %v245
  %v254 = vsel %vm93, %v226, 0
  %v257 = vsel %vm93, %v227, 0
  %259 = vmatprep.subr.bf16.mxu0 0
  %260 = vmatpush1.bf16.msra.mxu0 %v247
  %261 = vmatprep.subr.bf16.mxu0 0
  %262 = vmatpush1.bf16.msra.mxu0 %v248
  %263 = vmatprep.subr.bf16.mxu0 0
  %264 = vmatpush1.bf16.msra.mxu0 %v249
  %265 = vmatprep.subr.bf16.mxu0 0
  %266 = vmatpush1.bf16.msra.mxu0 0
  %267 = vmatprep.subr.bf16.mxu0 0
  %268 = vmatpush1.bf16.msra.mxu0 0
  %269 = vmatprep.subr.bf16.mxu0 0
  %270 = vmatpush1.bf16.msra.mxu0 0
  %271 = vmatprep.subr.bf16.mxu0 0
  %272 = vmatpush1.bf16.msra.mxu0 0
  %273 = vmatprep.subr.bf16.mxu0 0
  %274 = vmatpush1.bf16.msra.mxu0 0
  %275 = vmatprep.subr.bf16.mxu0 0
  %276 = vmatpush1.bf16.msra.mxu0 0
  %277 = vmatprep.subr.bf16.mxu0 0
  %278 = vmatpush1.bf16.msra.mxu0 0
  %279 = vmatprep.subr.bf16.mxu0 0
  %280 = vmatpush1.bf16.msra.mxu0 0
  %281 = vmatprep.subr.bf16.mxu0 0
  %282 = vmatpush1.bf16.msra.mxu0 0
  %283 = vmatprep.subr.bf16.mxu0 0
  %284 = vmatpush1.bf16.msra.mxu0 0
  %285 = vmatprep.subr.bf16.mxu0 0
  %286 = vmatpush1.bf16.msra.mxu0 0
  %287 = vmatprep.subr.bf16.mxu0 0
  %288 = vmatpush1.bf16.msra.mxu0 0
  %289 = vmatprep.subr.bf16.mxu0 0
  %290 = vmatpush1.bf16.msra.mxu0 0
  %291 = vmatprep.mubr.bf16.mxu0 0
  %292 = vmatmul.mubr.bf16.gmra.mrb[0].mxu0 %v254
  %v293 = vpop.f32.mrb[0].mxu0
  %v294 = vadd.f32 0.0, %v293
  %v295 = vpop.f32.mrb[0].mxu0
  %v296 = vpop.f32.mrb[0].mxu0
  %v297 = vadd.f32 0.0, %v296
  %v298 = vpop.f32.mrb[0].mxu0
  %299 = vmatprep.mubr.bf16.mxu0 0
  %300 = vmatmul.mubr.bf16.gmra.mrb[0].mxu0 %v257
  %v301 = vpop.f32.mrb[0].mxu0
  %v302 = vadd.f32 0.0, %v301
  %v303 = vpop.f32.mrb[0].mxu0
  %v304 = vpop.f32.mrb[0].mxu0
  %v305 = vadd.f32 0.0, %v304
  %v306 = vpop.f32.mrb[0].mxu0
  %307 = vdwg.mxu0
  %v308 = vadd.f32 %v208, %v294
  %v309 = vadd.f32 %v211, %v297
  %v310 = vadd.f32 %v216, %v302
  %v311 = vadd.f32 %v219, %v305
  %v313 = vlaneseq
  %v314 = vshrl.u32 %v313, 7
  %v315 = vsub.s32 0, %v314
  %v316 = vrot.slane %v48, %v315
  %v318 = vmul.f32 %v308, %v316
  %v319 = vmul.f32 %v309, %v316
  %v320 = vmul.f32 %v310, %v316
  %v321 = vmul.f32 %v311, %v316
  %v323 = vlaneseq
  %v324 = vshrl.u32 %v323, 7
  %v325 = vsub.s32 0, %v324
  %v326 = vrot.slane %v49, %v325
  %v328 = vadd.f32 %v318, %v326
  %v329 = vadd.f32 %v319, %v326
  %v330 = vadd.f32 %v320, %v326
  %v331 = vadd.f32 %v321, %v326
  %v332 = vmax.f32 %v328, 0.0
  %v333 = vmax.f32 %v329, 0.0
  %v334 = vmax.f32 %v330, 0.0
  %v335 = vmax.f32 %v331, 0.0
  %336 = vrot.lane.b32.xlu0 %v332, 64
  %v337 = vpop.permute.xlu0 %336
  %338 = vrot.lane.b32.xlu0 %v333, 64
  %v339 = vpop.permute.xlu0 %338
  %340 = vrot.lane.b32.xlu0 %v334, 64
  %v341 = vpop.permute.xlu0 %340
  %342 = vrot.lane.b32.xlu0 %v335, 64
  %v343 = vpop.permute.xlu0 %342
  %v344 = vmax.f32 %v332, %v337
  %v345 = vmax.f32 %v333, %v339
  %v346 = vmax.f32 %v334, %v341
  %v347 = vmax.f32 %v335, %v343
  %v352 = vcombine.high %v344, %v344
  %v354 = vunpack.c.l.s4 1983009808
  %v355 = vunpack.c.0.s8 %v354
  %v356 = vlaneseq
  %v357 = vshrl.u32 %v356, 7
  %v358 = vsub.s32 %v355, %v357
  %v359 = vrot.slane %v344, %v358
  %v361 = vunpack.c.l.s4 1983009808
  %v362 = vunpack.c.0.s8 %v361
  %v363 = vlaneseq
  %v364 = vshrl.u32 %v363, 7
  %v365 = vsub.s32 %v362, %v364
  %v366 = vrot.slane %v352, %v365
  %v367 = vcombine.high %v359, %v359
  %v368 = vcombine.high %v366, %v366
  %v369 = vcombine.high %v345, %v345
  %v371 = vunpack.c.l.s4 1983009808
  %v372 = vunpack.c.0.s8 %v371
  %v373 = vlaneseq
  %v374 = vshrl.u32 %v373, 7
  %v375 = vsub.s32 %v372, %v374
  %v376 = vrot.slane %v345, %v375
  %v378 = vunpack.c.l.s4 1983009808
  %v379 = vunpack.c.0.s8 %v378
  %v380 = vlaneseq
  %v381 = vshrl.u32 %v380, 7
  %v382 = vsub.s32 %v379, %v381
  %v383 = vrot.slane %v369, %v382
  %v384 = vcombine.high %v376, %v376
  %v385 = vcombine.high %v383, %v383
  %v386 = vcombine.high %v346, %v346
  %v388 = vunpack.c.l.s4 1983009808
  %v389 = vunpack.c.0.s8 %v388
  %v390 = vlaneseq
  %v391 = vshrl.u32 %v390, 7
  %v392 = vsub.s32 %v389, %v391
  %v393 = vrot.slane %v346, %v392
  %v395 = vunpack.c.l.s4 1983009808
  %v396 = vunpack.c.0.s8 %v395
  %v397 = vlaneseq
  %v398 = vshrl.u32 %v397, 7
  %v399 = vsub.s32 %v396, %v398
  %v400 = vrot.slane %v386, %v399
  %v401 = vcombine.high %v393, %v393
  %v402 = vcombine.high %v400, %v400
  %v403 = vcombine.high %v347, %v347
  %v405 = vunpack.c.l.s4 1983009808
  %v406 = vunpack.c.0.s8 %v405
  %v407 = vlaneseq
  %v408 = vshrl.u32 %v407, 7
  %v409 = vsub.s32 %v406, %v408
  %v410 = vrot.slane %v347, %v409
  %v412 = vunpack.c.l.s4 1983009808
  %v413 = vunpack.c.0.s8 %v412
  %v414 = vlaneseq
  %v415 = vshrl.u32 %v414, 7
  %v416 = vsub.s32 %v413, %v415
  %v417 = vrot.slane %v403, %v416
  %v418 = vcombine.high %v410, %v410
  %v419 = vcombine.high %v417, %v417
  %v436 = vrot.slane %v359, 7
  %v437 = vrot.slane %v436, 2
  %v438 = vrot.slane %v367, 7
  %v439 = vrot.slane %v438, 2
  %v440 = vrot.slane %v366, 7
  %v441 = vrot.slane %v440, 2
  %v442 = vrot.slane %v368, 7
  %v443 = vrot.slane %v442, 2
  %v444 = vrot.slane %v376, 7
  %v445 = vrot.slane %v444, 2
  %v446 = vrot.slane %v384, 7
  %v447 = vrot.slane %v446, 2
  %v448 = vrot.slane %v383, 7
  %v449 = vrot.slane %v448, 2
  %v450 = vrot.slane %v385, 7
  %v451 = vrot.slane %v450, 2
  %v452 = vrot.slane %v393, 7
  %v453 = vrot.slane %v452, 2
  %v454 = vrot.slane %v401, 7
  %v455 = vrot.slane %v454, 2
  %v456 = vrot.slane %v400, 7
  %v457 = vrot.slane %v456, 2
  %v458 = vrot.slane %v402, 7
  %v459 = vrot.slane %v458, 2
  %v460 = vrot.slane %v410, 7
  %v461 = vrot.slane %v460, 2
  %v462 = vrot.slane %v418, 7
  %v463 = vrot.slane %v462, 2
  %v464 = vrot.slane %v417, 7
  %v465 = vrot.slane %v464, 2
  %v466 = vrot.slane %v419, 7
  %v467 = vrot.slane %v466, 2
  %v484 = vmax.f32 %v359, %v437
  %v485 = vmax.f32 %v367, %v439
  %v486 = vmax.f32 %v366, %v441
  %v487 = vmax.f32 %v368, %v443
  %v488 = vmax.f32 %v376, %v445
  %v489 = vmax.f32 %v384, %v447
  %v490 = vmax.f32 %v383, %v449
  %v491 = vmax.f32 %v385, %v451
  %v492 = vmax.f32 %v393, %v453
  %v493 = vmax.f32 %v401, %v455
  %v494 = vmax.f32 %v400, %v457
  %v495 = vmax.f32 %v402, %v459
  %v496 = vmax.f32 %v410, %v461
  %v497 = vmax.f32 %v418, %v463
  %v498 = vmax.f32 %v417, %v465
  %v499 = vmax.f32 %v419, %v467
  %vm500 = vcmask 516096
  %501 = vst.msk [vmem:[#allocation2] sm:$0x1] %vm500, 0.0
  %502 = vst.msk [vmem:[#allocation2 + $0x10] sm:$0x1] %vm500, 0.0
  %503 = vst.msk [vmem:[#allocation2 + $0x9] sm:$0x1] %vm500, 0.0
  %504 = vst.msk [vmem:[#allocation2 + $0x19] sm:$0x1] %vm500, 0.0
  %v521 = vlaneseq
  %v522 = vshrl.u32 %v521, 7
  %v523 = vsub.s32 0, %v522
  %v524 = vrot.slane %v484, %v523
  %v525 = vlaneseq
  %v526 = vshrl.u32 %v525, 7
  %v527 = vsub.s32 0, %v526
  %v528 = vrot.slane %v485, %v527
  %v529 = vlaneseq
  %v530 = vshrl.u32 %v529, 7
  %v531 = vsub.s32 0, %v530
  %v532 = vrot.slane %v486, %v531
  %v533 = vlaneseq
  %v534 = vshrl.u32 %v533, 7
  %v535 = vsub.s32 0, %v534
  %v536 = vrot.slane %v487, %v535
  %v537 = vlaneseq
  %v538 = vshrl.u32 %v537, 7
  %v539 = vsub.s32 0, %v538
  %v540 = vrot.slane %v488, %v539
  %v541 = vlaneseq
  %v542 = vshrl.u32 %v541, 7
  %v543 = vsub.s32 0, %v542
  %v544 = vrot.slane %v489, %v543
  %v545 = vlaneseq
  %v546 = vshrl.u32 %v545, 7
  %v547 = vsub.s32 0, %v546
  %v548 = vrot.slane %v490, %v547
  %v549 = vlaneseq
  %v550 = vshrl.u32 %v549, 7
  %v551 = vsub.s32 0, %v550
  %v552 = vrot.slane %v491, %v551
  %v553 = vlaneseq
  %v554 = vshrl.u32 %v553, 7
  %v555 = vsub.s32 0, %v554
  %v556 = vrot.slane %v492, %v555
  %v557 = vlaneseq
  %v558 = vshrl.u32 %v557, 7
  %v559 = vsub.s32 0, %v558
  %v560 = vrot.slane %v493, %v559
  %v561 = vlaneseq
  %v562 = vshrl.u32 %v561, 7
  %v563 = vsub.s32 0, %v562
  %v564 = vrot.slane %v494, %v563
  %v565 = vlaneseq
  %v566 = vshrl.u32 %v565, 7
  %v567 = vsub.s32 0, %v566
  %v568 = vrot.slane %v495, %v567
  %v569 = vlaneseq
  %v570 = vshrl.u32 %v569, 7
  %v571 = vsub.s32 0, %v570
  %v572 = vrot.slane %v496, %v571
  %v573 = vlaneseq
  %v574 = vshrl.u32 %v573, 7
  %v575 = vsub.s32 0, %v574
  %v576 = vrot.slane %v497, %v575
  %v577 = vlaneseq
  %v578 = vshrl.u32 %v577, 7
  %v579 = vsub.s32 0, %v578
  %v580 = vrot.slane %v498, %v579
  %v581 = vlaneseq
  %v582 = vshrl.u32 %v581, 7
  %v583 = vsub.s32 0, %v582
  %v584 = vrot.slane %v499, %v583
  %vm585 = vcmask 1041409
  %v586 = vsel %vm585, %v528, %v524
  %vm587 = vcmask 1042434
  %v588 = vsel %vm587, %v532, %v586
  %vm589 = vcmask 1043459
  %v590 = vsel %vm589, %v536, %v588
  %vm591 = vcmask 1044484
  %v592 = vsel %vm591, %v540, %v590
  %vm593 = vcmask 1045509
  %v594 = vsel %vm593, %v544, %v592
  %vm595 = vcmask 1046534
  %v596 = vsel %vm595, %v548, %v594
  %vm597 = vcmask 1047559
  %v598 = vsel %vm597, %v552, %v596
  %v599 = vsel %vm585, %v560, %v556
  %v600 = vsel %vm587, %v564, %v599
  %v601 = vsel %vm589, %v568, %v600
  %v602 = vsel %vm591, %v572, %v601
  %v603 = vsel %vm593, %v576, %v602
  %v604 = vsel %vm595, %v580, %v603
  %v605 = vsel %vm597, %v584, %v604
  %vm608 = vcmask 523264
  %609 = vst.msk [vmem:[#allocation2 + $0x1] sm:$0xff] %vm608, %v598
  %610 = vst.msk [vmem:[#allocation2 + $0x11] sm:$0xff] %vm608, %v605
  %v611 = vld [vmem:[%s5] sm:$0x1]
  %v612 = vld [vmem:[%s6] sm:$0x1]
  %v613 = vld [vmem:[#allocation2] sm:$0xff]
  %v614 = vld [vmem:[#allocation2 + $0x10] sm:$0xff]
  %v615 = vpack.c.bf16 %v614, %v613
  %v616 = vld [vmem:[%s4] sm:$0xf]
  %v617 = vld [vmem:[%s4 + $0x4] sm:$0xf]
  %v618 = vld [vmem:[%s4 + $0x8] sm:$0xf]
  %v619 = vld [vmem:[%s4 + $0xc] sm:$0xf]
  %v620 = vld [vmem:[%s4 + $0x10] sm:$0xf]
  %v621 = vld [vmem:[%s4 + $0x14] sm:$0xf]
  %v622 = vld [vmem:[%s4 + $0x18] sm:$0xf]
  %v623 = vld [vmem:[%s4 + $0x1c] sm:$0xf]
  %v624 = vld [vmem:[#allocation2 + $0x1] sm:$0xff]
  %v625 = vld [vmem:[#allocation2 + $0x11] sm:$0xff]
  %v626 = vpack.c.bf16 %v625, %v624
  %s627 = scalar_lea.vmem %s4, 32
  %v628 = vld [vmem:[%s627] sm:$0xf]
  %v629 = vld [vmem:[%s627 + $0x4] sm:$0xf]
  %v630 = vld [vmem:[%s627 + $0x8] sm:$0xf]
  %v631 = vld [vmem:[%s627 + $0xc] sm:$0xf]
  %v632 = vld [vmem:[%s627 + $0x10] sm:$0xf]
  %v633 = vld [vmem:[%s627 + $0x14] sm:$0xf]
  %v634 = vld [vmem:[%s627 + $0x18] sm:$0xf]
  %v635 = vld [vmem:[%s627 + $0x1c] sm:$0xf]
  %v644 = vunpack.c.l.b16 %v628
  %v645 = vunpack.c.l.b16 %v629
  %v646 = vunpack.c.l.b16 %v630
  %v647 = vunpack.c.l.b16 %v631
  %v648 = vunpack.c.l.b16 %v632
  %v649 = vunpack.c.l.b16 %v633
  %v650 = vunpack.c.l.b16 %v634
  %v651 = vunpack.c.l.b16 %v635
  %v652 = vpack.c.b16 %v645, %v644
  %v653 = vpack.c.b16 %v647, %v646
  %v654 = vpack.c.b16 %v649, %v648
  %v655 = vpack.c.b16 %v651, %v650
  %v661 = vsel %vm608, %v626, 0
  %663 = vmatprep.subr.bf16.mxu0 0
  %664 = vmatpush1.bf16.msra.mxu0 %v652
  %665 = vmatprep.subr.bf16.mxu0 0
  %666 = vmatpush1.bf16.msra.mxu0 %v653
  %667 = vmatprep.subr.bf16.mxu0 0
  %668 = vmatpush1.bf16.msra.mxu0 %v654
  %669 = vmatprep.subr.bf16.mxu0 0
  %670 = vmatpush1.bf16.msra.mxu0 %v655
  %671 = vmatprep.subr.bf16.mxu0 0
  %672 = vmatpush1.bf16.msra.mxu0 0
  %673 = vmatprep.subr.bf16.mxu0 0
  %674 = vmatpush1.bf16.msra.mxu0 0
  %675 = vmatprep.subr.bf16.mxu0 0
  %676 = vmatpush1.bf16.msra.mxu0 0
  %677 = vmatprep.subr.bf16.mxu0 0
  %678 = vmatpush1.bf16.msra.mxu0 0
  %679 = vmatprep.subr.bf16.mxu0 0
  %680 = vmatpush1.bf16.msra.mxu0 0
  %681 = vmatprep.subr.bf16.mxu0 0
  %682 = vmatpush1.bf16.msra.mxu0 0
  %683 = vmatprep.subr.bf16.mxu0 0
  %684 = vmatpush1.bf16.msra.mxu0 0
  %685 = vmatprep.subr.bf16.mxu0 0
  %686 = vmatpush1.bf16.msra.mxu0 0
  %687 = vmatprep.subr.bf16.mxu0 0
  %688 = vmatpush1.bf16.msra.mxu0 0
  %689 = vmatprep.subr.bf16.mxu0 0
  %690 = vmatpush1.bf16.msra.mxu0 0
  %691 = vmatprep.subr.bf16.mxu0 0
  %692 = vmatpush1.bf16.msra.mxu0 0
  %693 = vmatprep.subr.bf16.mxu0 0
  %694 = vmatpush1.bf16.msra.mxu0 0
  %695 = vmatprep.mubr.bf16.mxu0 0
  %696 = vmatmul.mubr.bf16.gmra.mrb[0].mxu0 %v661
  %v697 = vpop.f32.mrb[0].mxu0
  %v698 = vadd.f32 0.0, %v697
  %v699 = vpop.f32.mrb[0].mxu0
  %v700 = vpop.f32.mrb[0].mxu0
  %v701 = vadd.f32 0.0, %v700
  %v702 = vpop.f32.mrb[0].mxu0
  %703 = vdwg.mxu0
  %v712 = vunpack.c.l.b16 %v616
  %v713 = vunpack.c.l.b16 %v617
  %v714 = vunpack.c.l.b16 %v618
  %v715 = vunpack.c.l.b16 %v619
  %v716 = vunpack.c.l.b16 %v620
  %v717 = vunpack.c.l.b16 %v621
  %v718 = vunpack.c.l.b16 %v622
  %v719 = vunpack.c.l.b16 %v623
  %v720 = vpack.c.b16 %v713, %v712
  %v721 = vpack.c.b16 %v715, %v714
  %v722 = vpack.c.b16 %v717, %v716
  %v723 = vpack.c.b16 %v719, %v718
  %v729 = vsel %vm608, %v615, 0
  %731 = vmatprep.subr.bf16.mxu0 0
  %732 = vmatpush1.bf16.msra.mxu0 %v720
  %733 = vmatprep.subr.bf16.mxu0 0
  %734 = vmatpush1.bf16.msra.mxu0 %v721
  %735 = vmatprep.subr.bf16.mxu0 0
  %736 = vmatpush1.bf16.msra.mxu0 %v722
  %737 = vmatprep.subr.bf16.mxu0 0
  %738 = vmatpush1.bf16.msra.mxu0 %v723
  %739 = vmatprep.subr.bf16.mxu0 0
  %740 = vmatpush1.bf16.msra.mxu0 0
  %741 = vmatprep.subr.bf16.mxu0 0
  %742 = vmatpush1.bf16.msra.mxu0 0
  %743 = vmatprep.subr.bf16.mxu0 0
  %744 = vmatpush1.bf16.msra.mxu0 0
  %745 = vmatprep.subr.bf16.mxu0 0
  %746 = vmatpush1.bf16.msra.mxu0 0
  %747 = vmatprep.subr.bf16.mxu0 0
  %748 = vmatpush1.bf16.msra.mxu0 0
  %749 = vmatprep.subr.bf16.mxu0 0
  %750 = vmatpush1.bf16.msra.mxu0 0
  %751 = vmatprep.subr.bf16.mxu0 0
  %752 = vmatpush1.bf16.msra.mxu0 0
  %753 = vmatprep.subr.bf16.mxu0 0
  %754 = vmatpush1.bf16.msra.mxu0 0
  %755 = vmatprep.subr.bf16.mxu0 0
  %756 = vmatpush1.bf16.msra.mxu0 0
  %757 = vmatprep.subr.bf16.mxu0 0
  %758 = vmatpush1.bf16.msra.mxu0 0
  %759 = vmatprep.subr.bf16.mxu0 0
  %760 = vmatpush1.bf16.msra.mxu0 0
  %761 = vmatprep.subr.bf16.mxu0 0
  %762 = vmatpush1.bf16.msra.mxu0 0
  %763 = vmatprep.mubr.bf16.mxu0 0
  %764 = vmatmul.mubr.bf16.gmra.mrb[0].mxu0 %v729
  %v765 = vpop.f32.mrb[0].mxu0
  %v766 = vadd.f32 %v698, %v765
  %v767 = vpop.f32.mrb[0].mxu0
  %v768 = vpop.f32.mrb[0].mxu0
  %v769 = vadd.f32 %v701, %v768
  %v770 = vpop.f32.mrb[0].mxu0
  %771 = vdwg.mxu0
  %v772 = vld [vmem:[#allocation2 + $0x2] sm:$0xff]
  %v773 = vld [vmem:[#allocation2 + $0x12] sm:$0xff]
  %v774 = vpack.c.bf16 %v773, %v772
  %s775 = scalar_lea.vmem %s4, 64
  %v776 = vld [vmem:[%s775] sm:$0xf]
  %v777 = vld [vmem:[%s775 + $0x4] sm:$0xf]
  %v778 = vld [vmem:[%s775 + $0x8] sm:$0xf]
  %v779 = vld [vmem:[%s775 + $0xc] sm:$0xf]
  %v780 = vld [vmem:[%s775 + $0x10] sm:$0xf]
  %v781 = vld [vmem:[%s775 + $0x14] sm:$0xf]
  %v782 = vld [vmem:[%s775 + $0x18] sm:$0xf]
  %v783 = vld [vmem:[%s775 + $0x1c] sm:$0xf]
  %v792 = vunpack.c.l.b16 %v776
  %v793 = vunpack.c.l.b16 %v777
  %v794 = vunpack.c.l.b16 %v778
  %v795 = vunpack.c.l.b16 %v779
  %v796 = vunpack.c.l.b16 %v780
  %v797 = vunpack.c.l.b16 %v781
  %v798 = vunpack.c.l.b16 %v782
  %v799 = vunpack.c.l.b16 %v783
  %v800 = vpack.c.b16 %v793, %v792
  %v801 = vpack.c.b16 %v795, %v794
  %v802 = vpack.c.b16 %v797, %v796
  %v803 = vpack.c.b16 %v799, %v798
  %v809 = vsel %vm608, %v774, 0
  %811 = vmatprep.subr.bf16.mxu0 0
  %812 = vmatpush1.bf16.msra.mxu0 %v800
  %813 = vmatprep.subr.bf16.mxu0 0
  %814 = vmatpush1.bf16.msra.mxu0 %v801
  %815 = vmatprep.subr.bf16.mxu0 0
  %816 = vmatpush1.bf16.msra.mxu0 %v802
  %817 = vmatprep.subr.bf16.mxu0 0
  %818 = vmatpush1.bf16.msra.mxu0 %v803
  %819 = vmatprep.subr.bf16.mxu0 0
  %820 = vmatpush1.bf16.msra.mxu0 0
  %821 = vmatprep.subr.bf16.mxu0 0
  %822 = vmatpush1.bf16.msra.mxu0 0
  %823 = vmatprep.subr.bf16.mxu0 0
  %824 = vmatpush1.bf16.msra.mxu0 0
  %825 = vmatprep.subr.bf16.mxu0 0
  %826 = vmatpush1.bf16.msra.mxu0 0
  %827 = vmatprep.subr.bf16.mxu0 0
  %828 = vmatpush1.bf16.msra.mxu0 0
  %829 = vmatprep.subr.bf16.mxu0 0
  %830 = vmatpush1.bf16.msra.mxu0 0
  %831 = vmatprep.subr.bf16.mxu0 0
  %832 = vmatpush1.bf16.msra.mxu0 0
  %833 = vmatprep.subr.bf16.mxu0 0
  %834 = vmatpush1.bf16.msra.mxu0 0
  %835 = vmatprep.subr.bf16.mxu0 0
  %836 = vmatpush1.bf16.msra.mxu0 0
  %837 = vmatprep.subr.bf16.mxu0 0
  %838 = vmatpush1.bf16.msra.mxu0 0
  %839 = vmatprep.subr.bf16.mxu0 0
  %840 = vmatpush1.bf16.msra.mxu0 0
  %841 = vmatprep.subr.bf16.mxu0 0
  %842 = vmatpush1.bf16.msra.mxu0 0
  %843 = vmatprep.mubr.bf16.mxu0 0
  %844 = vmatmul.mubr.bf16.gmra.mrb[0].mxu0 %v809
  %v845 = vpop.f32.mrb[0].mxu0
  %v846 = vadd.f32 0.0, %v845
  %v847 = vpop.f32.mrb[0].mxu0
  %v848 = vpop.f32.mrb[0].mxu0
  %v849 = vadd.f32 0.0, %v848
  %v850 = vpop.f32.mrb[0].mxu0
  %851 = vdwg.mxu0
  %v852 = vadd.f32 %v766, %v846
  %v853 = vadd.f32 %v769, %v849
  %v855 = vlaneseq
  %v856 = vshrl.u32 %v855, 7
  %v857 = vsub.s32 0, %v856
  %v858 = vrot.slane %v611, %v857
  %v860 = vmul.f32 %v852, %v858
  %v861 = vmul.f32 %v853, %v858
  %v863 = vlaneseq
  %v864 = vshrl.u32 %v863, 7
  %v865 = vsub.s32 0, %v864
  %v866 = vrot.slane %v612, %v865
  %v868 = vadd.f32 %v860, %v866
  %v869 = vadd.f32 %v861, %v866
  %v870 = vmax.f32 %v868, 0.0
  %v871 = vmax.f32 %v869, 0.0
  %872 = vrot.lane.b32.xlu0 %v870, 64
  %v873 = vpop.permute.xlu0 %872
  %874 = vrot.lane.b32.xlu0 %v871, 64
  %v875 = vpop.permute.xlu0 %874
  %v876 = vmax.f32 %v870, %v873
  %v877 = vmax.f32 %v871, %v875
  %v880 = vcombine.high %v876, %v876
  %v882 = vunpack.c.l.s4 1983009808
  %v883 = vunpack.c.0.s8 %v882
  %v884 = vlaneseq
  %v885 = vshrl.u32 %v884, 7
  %v886 = vsub.s32 %v883, %v885
  %v887 = vrot.slane %v876, %v886
  %v889 = vunpack.c.l.s4 1983009808
  %v890 = vunpack.c.0.s8 %v889
  %v891 = vlaneseq
  %v892 = vshrl.u32 %v891, 7
  %v893 = vsub.s32 %v890, %v892
  %v894 = vrot.slane %v880, %v893
  %v895 = vcombine.high %v887, %v887
  %v896 = vcombine.high %v894, %v894
  %v897 = vcombine.high %v877, %v877
  %v899 = vunpack.c.l.s4 1983009808
  %v900 = vunpack.c.0.s8 %v899
  %v901 = vlaneseq
  %v902 = vshrl.u32 %v901, 7
  %v903 = vsub.s32 %v900, %v902
  %v904 = vrot.slane %v877, %v903
  %v906 = vunpack.c.l.s4 1983009808
  %v907 = vunpack.c.0.s8 %v906
  %v908 = vlaneseq
  %v909 = vshrl.u32 %v908, 7
  %v910 = vsub.s32 %v907, %v909
  %v911 = vrot.slane %v897, %v910
  %v912 = vcombine.high %v904, %v904
  %v913 = vcombine.high %v911, %v911
  %v922 = vrot.slane %v887, 7
  %v923 = vrot.slane %v922, 2
  %v924 = vrot.slane %v895, 7
  %v925 = vrot.slane %v924, 2
  %v926 = vrot.slane %v894, 7
  %v927 = vrot.slane %v926, 2
  %v928 = vrot.slane %v896, 7
  %v929 = vrot.slane %v928, 2
  %v930 = vrot.slane %v904, 7
  %v931 = vrot.slane %v930, 2
  %v932 = vrot.slane %v912, 7
  %v933 = vrot.slane %v932, 2
  %v934 = vrot.slane %v911, 7
  %v935 = vrot.slane %v934, 2
  %v936 = vrot.slane %v913, 7
  %v937 = vrot.slane %v936, 2
  %v946 = vmax.f32 %v887, %v923
  %v947 = vmax.f32 %v895, %v925
  %v948 = vmax.f32 %v894, %v927
  %v949 = vmax.f32 %v896, %v929
  %v950 = vmax.f32 %v904, %v931
  %v951 = vmax.f32 %v912, %v933
  %v952 = vmax.f32 %v911, %v935
  %v953 = vmax.f32 %v913, %v937
  %v954 = vpack.c.bf16 %v946, %v946
  %v955 = vpack.c.bf16 %v947, %v947
  %v956 = vpack.c.bf16 %v948, %v948
  %v957 = vpack.c.bf16 %v949, %v949
  %v958 = vpack.c.bf16 %v950, %v950
  %v959 = vpack.c.bf16 %v951, %v951
  %v960 = vpack.c.bf16 %v952, %v952
  %v961 = vpack.c.bf16 %v953, %v953
  %v962 = vld [vmem:[%s7] sm:$0xf]
  %v963 = vld [vmem:[%s7 + $0x4] sm:$0xf]
  %v964 = vld [vmem:[%s7 + $0x8] sm:$0xf]
  %v965 = vld [vmem:[%s7 + $0xc] sm:$0xf]
  %v966 = vld [vmem:[%s7 + $0x10] sm:$0xf]
  %v967 = vld [vmem:[%s7 + $0x14] sm:$0xf]
  %v968 = vld [vmem:[%s7 + $0x18] sm:$0xf]
  %v969 = vld [vmem:[%s7 + $0x1c] sm:$0xf]
  %s970 = scalar_lea.vmem %s7, 32
  %v971 = vld [vmem:[%s970] sm:$0xf]
  %v972 = vld [vmem:[%s970 + $0x4] sm:$0xf]
  %v973 = vld [vmem:[%s970 + $0x8] sm:$0xf]
  %v974 = vld [vmem:[%s970 + $0xc] sm:$0xf]
  %v975 = vld [vmem:[%s970 + $0x10] sm:$0xf]
  %v976 = vld [vmem:[%s970 + $0x14] sm:$0xf]
  %v977 = vld [vmem:[%s970 + $0x18] sm:$0xf]
  %v978 = vld [vmem:[%s970 + $0x1c] sm:$0xf]
  %v981 = vunpack.c.l.b16 %v955
  %v982 = vunpack.c.l.b16 %v959
  %v983 = vrot.slane %v982, 7
  %v984 = vsel %vm585, %v983, %v981
  %v985 = vpack.c.b16 %v984, %v984
  %v994 = vunpack.c.l.b16 %v971
  %v995 = vunpack.c.l.b16 %v972
  %v996 = vunpack.c.l.b16 %v973
  %v997 = vunpack.c.l.b16 %v974
  %v998 = vunpack.c.l.b16 %v975
  %v999 = vunpack.c.l.b16 %v976
  %v1000 = vunpack.c.l.b16 %v977
  %v1001 = vunpack.c.l.b16 %v978
  %v1002 = vpack.c.b16 %v995, %v994
  %v1003 = vpack.c.b16 %v997, %v996
  %v1004 = vpack.c.b16 %v999, %v998
  %v1005 = vpack.c.b16 %v1001, %v1000
  %v1011 = vsel %vm608, %v985, 0
  %1013 = vmatprep.subr.bf16.mxu0 0
  %1014 = vmatpush1.bf16.msra.mxu0 %v1002
  %1015 = vmatprep.subr.bf16.mxu0 0
  %1016 = vmatpush1.bf16.msra.mxu0 %v1003
  %1017 = vmatprep.subr.bf16.mxu0 0
  %1018 = vmatpush1.bf16.msra.mxu0 %v1004
  %1019 = vmatprep.subr.bf16.mxu0 0
  %1020 = vmatpush1.bf16.msra.mxu0 %v1005
  %1021 = vmatprep.subr.bf16.mxu0 0
  %1022 = vmatpush1.bf16.msra.mxu0 0
  %1023 = vmatprep.subr.bf16.mxu0 0
  %1024 = vmatpush1.bf16.msra.mxu0 0
  %1025 = vmatprep.subr.bf16.mxu0 0
  %1026 = vmatpush1.bf16.msra.mxu0 0
  %1027 = vmatprep.subr.bf16.mxu0 0
  %1028 = vmatpush1.bf16.msra.mxu0 0
  %1029 = vmatprep.subr.bf16.mxu0 0
  %1030 = vmatpush1.bf16.msra.mxu0 0
  %1031 = vmatprep.subr.bf16.mxu0 0
  %1032 = vmatpush1.bf16.msra.mxu0 0
  %1033 = vmatprep.subr.bf16.mxu0 0
  %1034 = vmatpush1.bf16.msra.mxu0 0
  %1035 = vmatprep.subr.bf16.mxu0 0
  %1036 = vmatpush1.bf16.msra.mxu0 0
  %1037 = vmatprep.subr.bf16.mxu0 0
  %1038 = vmatpush1.bf16.msra.mxu0 0
  %1039 = vmatprep.subr.bf16.mxu0 0
  %1040 = vmatpush1.bf16.msra.mxu0 0
  %1041 = vmatprep.subr.bf16.mxu0 0
  %1042 = vmatpush1.bf16.msra.mxu0 0
  %1043 = vmatprep.subr.bf16.mxu0 0
  %1044 = vmatpush1.bf16.msra.mxu0 0
  %1045 = vmatprep.mubr.bf16.mxu0 0
  %1046 = vmatmul.mubr.bf16.gmra.mrb[0].mxu0 %v1011
  %v1047 = vpop.f32.mrb[0].mxu0
  %v1048 = vadd.f32 0.0, %v1047
  %v1049 = vpop.f32.mrb[0].mxu0
  %v1050 = vpop.f32.mrb[0].mxu0
  %v1051 = vpop.f32.mrb[0].mxu0
  %1052 = vdwg.mxu0
  %v1055 = vunpack.c.l.b16 %v954
  %v1056 = vunpack.c.l.b16 %v958
  %v1057 = vrot.slane %v1056, 7
  %v1058 = vsel %vm585, %v1057, %v1055
  %v1059 = vpack.c.b16 %v1058, %v1058
  %v1068 = vunpack.c.l.b16 %v962
  %v1069 = vunpack.c.l.b16 %v963
  %v1070 = vunpack.c.l.b16 %v964
  %v1071 = vunpack.c.l.b16 %v965
  %v1072 = vunpack.c.l.b16 %v966
  %v1073 = vunpack.c.l.b16 %v967
  %v1074 = vunpack.c.l.b16 %v968
  %v1075 = vunpack.c.l.b16 %v969
  %v1076 = vpack.c.b16 %v1069, %v1068
  %v1077 = vpack.c.b16 %v1071, %v1070
  %v1078 = vpack.c.b16 %v1073, %v1072
  %v1079 = vpack.c.b16 %v1075, %v1074
  %v1085 = vsel %vm608, %v1059, 0
  %1087 = vmatprep.subr.bf16.mxu0 0
  %1088 = vmatpush1.bf16.msra.mxu0 %v1076
  %1089 = vmatprep.subr.bf16.mxu0 0
  %1090 = vmatpush1.bf16.msra.mxu0 %v1077
  %1091 = vmatprep.subr.bf16.mxu0 0
  %1092 = vmatpush1.bf16.msra.mxu0 %v1078
  %1093 = vmatprep.subr.bf16.mxu0 0
  %1094 = vmatpush1.bf16.msra.mxu0 %v1079
  %1095 = vmatprep.subr.bf16.mxu0 0
  %1096 = vmatpush1.bf16.msra.mxu0 0
  %1097 = vmatprep.subr.bf16.mxu0 0
  %1098 = vmatpush1.bf16.msra.mxu0 0
  %1099 = vmatprep.subr.bf16.mxu0 0
  %1100 = vmatpush1.bf16.msra.mxu0 0
  %1101 = vmatprep.subr.bf16.mxu0 0
  %1102 = vmatpush1.bf16.msra.mxu0 0
  %1103 = vmatprep.subr.bf16.mxu0 0
  %1104 = vmatpush1.bf16.msra.mxu0 0
  %1105 = vmatprep.subr.bf16.mxu0 0
  %1106 = vmatpush1.bf16.msra.mxu0 0
  %1107 = vmatprep.subr.bf16.mxu0 0
  %1108 = vmatpush1.bf16.msra.mxu0 0
  %1109 = vmatprep.subr.bf16.mxu0 0
  %1110 = vmatpush1.bf16.msra.mxu0 0
  %1111 = vmatprep.subr.bf16.mxu0 0
  %1112 = vmatpush1.bf16.msra.mxu0 0
  %1113 = vmatprep.subr.bf16.mxu0 0
  %1114 = vmatpush1.bf16.msra.mxu0 0
  %1115 = vmatprep.subr.bf16.mxu0 0
  %1116 = vmatpush1.bf16.msra.mxu0 0
  %1117 = vmatprep.subr.bf16.mxu0 0
  %1118 = vmatpush1.bf16.msra.mxu0 0
  %1119 = vmatprep.mubr.bf16.mxu0 0
  %1120 = vmatmul.mubr.bf16.gmra.mrb[0].mxu0 %v1085
  %v1121 = vpop.f32.mrb[0].mxu0
  %v1122 = vadd.f32 %v1048, %v1121
  %v1123 = vpop.f32.mrb[0].mxu0
  %v1124 = vpop.f32.mrb[0].mxu0
  %v1125 = vpop.f32.mrb[0].mxu0
  %1126 = vdwg.mxu0
  %s1127 = scalar_lea.vmem %s7, 64
  %v1128 = vld [vmem:[%s1127] sm:$0xf]
  %v1129 = vld [vmem:[%s1127 + $0x4] sm:$0xf]
  %v1130 = vld [vmem:[%s1127 + $0x8] sm:$0xf]
  %v1131 = vld [vmem:[%s1127 + $0xc] sm:$0xf]
  %v1132 = vld [vmem:[%s1127 + $0x10] sm:$0xf]
  %v1133 = vld [vmem:[%s1127 + $0x14] sm:$0xf]
  %v1134 = vld [vmem:[%s1127 + $0x18] sm:$0xf]
  %v1135 = vld [vmem:[%s1127 + $0x1c] sm:$0xf]
  %v1138 = vunpack.c.l.b16 %v956
  %v1139 = vunpack.c.l.b16 %v960
  %v1140 = vrot.slane %v1139, 7
  %v1141 = vsel %vm585, %v1140, %v1138
  %v1142 = vpack.c.b16 %v1141, %v1141
  %v1151 = vunpack.c.l.b16 %v1128
  %v1152 = vunpack.c.l.b16 %v1129
  %v1153 = vunpack.c.l.b16 %v1130
  %v1154 = vunpack.c.l.b16 %v1131
  %v1155 = vunpack.c.l.b16 %v1132
  %v1156 = vunpack.c.l.b16 %v1133
  %v1157 = vunpack.c.l.b16 %v1134
  %v1158 = vunpack.c.l.b16 %v1135
  %v1159 = vpack.c.b16 %v1152, %v1151
  %v1160 = vpack.c.b16 %v1154, %v1153
  %v1161 = vpack.c.b16 %v1156, %v1155
  %v1162 = vpack.c.b16 %v1158, %v1157
  %v1168 = vsel %vm608, %v1142, 0
  %1170 = vmatprep.subr.bf16.mxu0 0
  %1171 = vmatpush1.bf16.msra.mxu0 %v1159
  %1172 = vmatprep.subr.bf16.mxu0 0
  %1173 = vmatpush1.bf16.msra.mxu0 %v1160
  %1174 = vmatprep.subr.bf16.mxu0 0
  %1175 = vmatpush1.bf16.msra.mxu0 %v1161
  %1176 = vmatprep.subr.bf16.mxu0 0
  %1177 = vmatpush1.bf16.msra.mxu0 %v1162
  %1178 = vmatprep.subr.bf16.mxu0 0
  %1179 = vmatpush1.bf16.msra.mxu0 0
  %1180 = vmatprep.subr.bf16.mxu0 0
  %1181 = vmatpush1.bf16.msra.mxu0 0
  %1182 = vmatprep.subr.bf16.mxu0 0
  %1183 = vmatpush1.bf16.msra.mxu0 0
  %1184 = vmatprep.subr.bf16.mxu0 0
  %1185 = vmatpush1.bf16.msra.mxu0 0
  %1186 = vmatprep.subr.bf16.mxu0 0
  %1187 = vmatpush1.bf16.msra.mxu0 0
  %1188 = vmatprep.subr.bf16.mxu0 0
  %1189 = vmatpush1.bf16.msra.mxu0 0
  %1190 = vmatprep.subr.bf16.mxu0 0
  %1191 = vmatpush1.bf16.msra.mxu0 0
  %1192 = vmatprep.subr.bf16.mxu0 0
  %1193 = vmatpush1.bf16.msra.mxu0 0
  %1194 = vmatprep.subr.bf16.mxu0 0
  %1195 = vmatpush1.bf16.msra.mxu0 0
  %1196 = vmatprep.subr.bf16.mxu0 0
  %1197 = vmatpush1.bf16.msra.mxu0 0
  %1198 = vmatprep.subr.bf16.mxu0 0
  %1199 = vmatpush1.bf16.msra.mxu0 0
  %1200 = vmatprep.subr.bf16.mxu0 0
  %1201 = vmatpush1.bf16.msra.mxu0 0
  %1202 = vmatprep.mubr.bf16.mxu0 0
  %1203 = vmatmul.mubr.bf16.gmra.mrb[0].mxu0 %v1168
  %v1204 = vpop.f32.mrb[0].mxu0
  %v1205 = vadd.f32 0.0, %v1204
  %v1206 = vpop.f32.mrb[0].mxu0
  %v1207 = vpop.f32.mrb[0].mxu0
  %v1208 = vpop.f32.mrb[0].mxu0
  %1209 = vdwg.mxu0
  %v1210 = vadd.f32 %v1122, %v1205
  %s1211 = scalar_lea.vmem %s7, 96
  %v1212 = vld [vmem:[%s1211] sm:$0xf]
  %v1213 = vld [vmem:[%s1211 + $0x4] sm:$0xf]
  %v1214 = vld [vmem:[%s1211 + $0x8] sm:$0xf]
  %v1215 = vld [vmem:[%s1211 + $0xc] sm:$0xf]
  %v1216 = vld [vmem:[%s1211 + $0x10] sm:$0xf]
  %v1217 = vld [vmem:[%s1211 + $0x14] sm:$0xf]
  %v1218 = vld [vmem:[%s1211 + $0x18] sm:$0xf]
  %v1219 = vld [vmem:[%s1211 + $0x1c] sm:$0xf]
  %v1222 = vunpack.c.l.b16 %v957
  %v1223 = vunpack.c.l.b16 %v961
  %v1224 = vrot.slane %v1223, 7
  %v1225 = vsel %vm585, %v1224, %v1222
  %v1226 = vpack.c.b16 %v1225, %v1225
  %v1235 = vunpack.c.l.b16 %v1212
  %v1236 = vunpack.c.l.b16 %v1213
  %v1237 = vunpack.c.l.b16 %v1214
  %v1238 = vunpack.c.l.b16 %v1215
  %v1239 = vunpack.c.l.b16 %v1216
  %v1240 = vunpack.c.l.b16 %v1217
  %v1241 = vunpack.c.l.b16 %v1218
  %v1242 = vunpack.c.l.b16 %v1219
  %v1243 = vpack.c.b16 %v1236, %v1235
  %v1244 = vpack.c.b16 %v1238, %v1237
  %v1245 = vpack.c.b16 %v1240, %v1239
  %v1246 = vpack.c.b16 %v1242, %v1241
  %v1252 = vsel %vm608, %v1226, 0
  %1254 = vmatprep.subr.bf16.mxu0 0
  %1255 = vmatpush1.bf16.msra.mxu0 %v1243
  %1256 = vmatprep.subr.bf16.mxu0 0
  %1257 = vmatpush1.bf16.msra.mxu0 %v1244
  %1258 = vmatprep.subr.bf16.mxu0 0
  %1259 = vmatpush1.bf16.msra.mxu0 %v1245
  %1260 = vmatprep.subr.bf16.mxu0 0
  %1261 = vmatpush1.bf16.msra.mxu0 %v1246
  %1262 = vmatprep.subr.bf16.mxu0 0
  %1263 = vmatpush1.bf16.msra.mxu0 0
  %1264 = vmatprep.subr.bf16.mxu0 0
  %1265 = vmatpush1.bf16.msra.mxu0 0
  %1266 = vmatprep.subr.bf16.mxu0 0
  %1267 = vmatpush1.bf16.msra.mxu0 0
  %1268 = vmatprep.subr.bf16.mxu0 0
  %1269 = vmatpush1.bf16.msra.mxu0 0
  %1270 = vmatprep.subr.bf16.mxu0 0
  %1271 = vmatpush1.bf16.msra.mxu0 0
  %1272 = vmatprep.subr.bf16.mxu0 0
  %1273 = vmatpush1.bf16.msra.mxu0 0
  %1274 = vmatprep.subr.bf16.mxu0 0
  %1275 = vmatpush1.bf16.msra.mxu0 0
  %1276 = vmatprep.subr.bf16.mxu0 0
  %1277 = vmatpush1.bf16.msra.mxu0 0
  %1278 = vmatprep.subr.bf16.mxu0 0
  %1279 = vmatpush1.bf16.msra.mxu0 0
  %1280 = vmatprep.subr.bf16.mxu0 0
  %1281 = vmatpush1.bf16.msra.mxu0 0
  %1282 = vmatprep.subr.bf16.mxu0 0
  %1283 = vmatpush1.bf16.msra.mxu0 0
  %1284 = vmatprep.subr.bf16.mxu0 0
  %1285 = vmatpush1.bf16.msra.mxu0 0
  %1286 = vmatprep.mubr.bf16.mxu0 0
  %1287 = vmatmul.mubr.bf16.gmra.mrb[0].mxu0 %v1252
  %v1288 = vpop.f32.mrb[0].mxu0
  %v1289 = vadd.f32 0.0, %v1288
  %v1290 = vpop.f32.mrb[0].mxu0
  %v1291 = vpop.f32.mrb[0].mxu0
  %v1292 = vpop.f32.mrb[0].mxu0
  %1293 = vdwg.mxu0
  %v1294 = vadd.f32 %v1210, %v1289
  %v1295 = vld [vmem:[%s8] sm:$0x1]
  %v1297 = vlaneseq
  %v1298 = vshrl.u32 %v1297, 7
  %v1299 = vsub.s32 0, %v1298
  %v1300 = vrot.slane %v1295, %v1299
  %v1302 = vadd.f32 %v1294, %v1300
  %v1303 = vmax.f32 %v1302, 0.0
  %v1304 = vpack.c.bf16 %v1303, %v1303
  %v1305 = vld [vmem:[%s10] sm:$0xf]
  %v1306 = vld [vmem:[%s10 + $0x4] sm:$0xf]
  %v1307 = vld [vmem:[%s10 + $0x8] sm:$0xf]
  %v1308 = vld [vmem:[%s10 + $0xc] sm:$0xf]
  %v1309 = vld [vmem:[%s11] sm:$0x1]
  %v1311 = vlaneseq
  %v1312 = vshrl.u32 %v1311, 7
  %v1313 = vsub.s32 0, %v1312
  %v1314 = vrot.slane %v1309, %v1313
  %v1320 = vunpack.c.l.b16 %v1305
  %v1321 = vunpack.c.l.b16 %v1306
  %v1322 = vunpack.c.l.b16 %v1307
  %v1323 = vunpack.c.l.b16 %v1308
  %v1324 = vpack.c.b16 %v1321, %v1320
  %v1325 = vpack.c.b16 %v1323, %v1322
  %vm1328 = vcmask 261120
  %v1330 = vsel %vm1328, %v1304, 0
  %1332 = vmatprep.subr.bf16.mxu0 0
  %1333 = vmatpush1.bf16.msra.mxu0 %v1324
  %1334 = vmatprep.subr.bf16.mxu0 0
  %1335 = vmatpush1.bf16.msra.mxu0 %v1325
  %1336 = vmatprep.subr.bf16.mxu0 0
  %1337 = vmatpush1.bf16.msra.mxu0 0
  %1338 = vmatprep.subr.bf16.mxu0 0
  %1339 = vmatpush1.bf16.msra.mxu0 0
  %1340 = vmatprep.subr.bf16.mxu0 0
  %1341 = vmatpush1.bf16.msra.mxu0 0
  %1342 = vmatprep.subr.bf16.mxu0 0
  %1343 = vmatpush1.bf16.msra.mxu0 0
  %1344 = vmatprep.subr.bf16.mxu0 0
  %1345 = vmatpush1.bf16.msra.mxu0 0
  %1346 = vmatprep.subr.bf16.mxu0 0
  %1347 = vmatpush1.bf16.msra.mxu0 0
  %1348 = vmatprep.subr.bf16.mxu0 0
  %1349 = vmatpush1.bf16.msra.mxu0 0
  %1350 = vmatprep.subr.bf16.mxu0 0
  %1351 = vmatpush1.bf16.msra.mxu0 0
  %1352 = vmatprep.subr.bf16.mxu0 0
  %1353 = vmatpush1.bf16.msra.mxu0 0
  %1354 = vmatprep.subr.bf16.mxu0 0
  %1355 = vmatpush1.bf16.msra.mxu0 0
  %1356 = vmatprep.subr.bf16.mxu0 0
  %1357 = vmatpush1.bf16.msra.mxu0 0
  %1358 = vmatprep.subr.bf16.mxu0 0
  %1359 = vmatpush1.bf16.msra.mxu0 0
  %1360 = vmatprep.subr.bf16.mxu0 0
  %1361 = vmatpush1.bf16.msra.mxu0 0
  %1362 = vmatprep.subr.bf16.mxu0 0
  %1363 = vmatpush1.bf16.msra.mxu0 0
  %1364 = vmatprep.mubr.bf16.mxu0 0
  %1365 = vmatmul.mubr.bf16.gmra.mrb[0].mxu0 %v1330
  %v1366 = vpop.f32.mrb[0].mxu0
  %v1367 = vadd.f32 %v1314, %v1366
  %v1368 = vpop.f32.mrb[0].mxu0
  %v1369 = vpop.f32.mrb[0].mxu0
  %v1370 = vpop.f32.mrb[0].mxu0
  %1371 = vdwg.mxu0
  %v1372 = vld [vmem:[%s9] sm:$0xf]
  %v1373 = vld [vmem:[%s9 + $0x4] sm:$0xf]
  %v1374 = vld [vmem:[%s9 + $0x8] sm:$0xf]
  %v1375 = vld [vmem:[%s9 + $0xc] sm:$0xf]
  %v1376 = vpack.c.bf16 %v1367, %v1367
  %v1377 = vld [vmem:[%s12] sm:$0xf]
  %v1378 = vld [vmem:[%s12 + $0x4] sm:$0xf]
  %v1379 = vld [vmem:[%s12 + $0x8] sm:$0xf]
  %v1380 = vld [vmem:[%s12 + $0xc] sm:$0xf]
  %v1385 = vunpack.c.l.b16 %v1377
  %v1386 = vunpack.c.l.b16 %v1378
  %v1387 = vunpack.c.l.b16 %v1379
  %v1388 = vunpack.c.l.b16 %v1380
  %v1389 = vpack.c.b16 %v1386, %v1385
  %v1390 = vpack.c.b16 %v1388, %v1387
  %v1394 = vsel %vm1328, %v1376, 0
  %1396 = vmatprep.subr.bf16.mxu0 0
  %1397 = vmatpush1.bf16.msra.mxu0 %v1389
  %1398 = vmatprep.subr.bf16.mxu0 0
  %1399 = vmatpush1.bf16.msra.mxu0 %v1390
  %1400 = vmatprep.subr.bf16.mxu0 0
  %1401 = vmatpush1.bf16.msra.mxu0 0
  %1402 = vmatprep.subr.bf16.mxu0 0
  %1403 = vmatpush1.bf16.msra.mxu0 0
  %1404 = vmatprep.subr.bf16.mxu0 0
  %1405 = vmatpush1.bf16.msra.mxu0 0
  %1406 = vmatprep.subr.bf16.mxu0 0
  %1407 = vmatpush1.bf16.msra.mxu0 0
  %1408 = vmatprep.subr.bf16.mxu0 0
  %1409 = vmatpush1.bf16.msra.mxu0 0
  %1410 = vmatprep.subr.bf16.mxu0 0
  %1411 = vmatpush1.bf16.msra.mxu0 0
  %1412 = vmatprep.subr.bf16.mxu0 0
  %1413 = vmatpush1.bf16.msra.mxu0 0
  %1414 = vmatprep.subr.bf16.mxu0 0
  %1415 = vmatpush1.bf16.msra.mxu0 0
  %1416 = vmatprep.subr.bf16.mxu0 0
  %1417 = vmatpush1.bf16.msra.mxu0 0
  %1418 = vmatprep.subr.bf16.mxu0 0
  %1419 = vmatpush1.bf16.msra.mxu0 0
  %1420 = vmatprep.subr.bf16.mxu0 0
  %1421 = vmatpush1.bf16.msra.mxu0 0
  %1422 = vmatprep.subr.bf16.mxu0 0
  %1423 = vmatpush1.bf16.msra.mxu0 0
  %1424 = vmatprep.subr.bf16.mxu0 0
  %1425 = vmatpush1.bf16.msra.mxu0 0
  %1426 = vmatprep.subr.bf16.mxu0 0
  %1427 = vmatpush1.bf16.msra.mxu0 0
  %1428 = vmatprep.mubr.bf16.mxu0 0
  %1429 = vmatmul.mubr.bf16.gmra.mrb[0].mxu0 %v1394
  %v1430 = vpop.f32.mrb[0].mxu0
  %v1431 = vadd.f32 0.0, %v1430
  %v1432 = vpop.f32.mrb[0].mxu0
  %v1433 = vpop.f32.mrb[0].mxu0
  %v1434 = vpop.f32.mrb[0].mxu0
  %1435 = vdwg.mxu0
  %v1440 = vunpack.c.l.b16 %v1372
  %v1441 = vunpack.c.l.b16 %v1373
  %v1442 = vunpack.c.l.b16 %v1374
  %v1443 = vunpack.c.l.b16 %v1375
  %v1444 = vpack.c.b16 %v1441, %v1440
  %v1445 = vpack.c.b16 %v1443, %v1442
  %1448 = vmatprep.subr.bf16.mxu0 0
  %1449 = vmatpush1.bf16.msra.mxu0 %v1444
  %1450 = vmatprep.subr.bf16.mxu0 0
  %1451 = vmatpush1.bf16.msra.mxu0 %v1445
  %1452 = vmatprep.subr.bf16.mxu0 0
  %1453 = vmatpush1.bf16.msra.mxu0 0
  %1454 = vmatprep.subr.bf16.mxu0 0
  %1455 = vmatpush1.bf16.msra.mxu0 0
  %1456 = vmatprep.subr.bf16.mxu0 0
  %1457 = vmatpush1.bf16.msra.mxu0 0
  %1458 = vmatprep.subr.bf16.mxu0 0
  %1459 = vmatpush1.bf16.msra.mxu0 0
  %1460 = vmatprep.subr.bf16.mxu0 0
  %1461 = vmatpush1.bf16.msra.mxu0 0
  %1462 = vmatprep.subr.bf16.mxu0 0
  %1463 = vmatpush1.bf16.msra.mxu0 0
  %1464 = vmatprep.subr.bf16.mxu0 0
  %1465 = vmatpush1.bf16.msra.mxu0 0
  %1466 = vmatprep.subr.bf16.mxu0 0
  %1467 = vmatpush1.bf16.msra.mxu0 0
  %1468 = vmatprep.subr.bf16.mxu0 0
  %1469 = vmatpush1.bf16.msra.mxu0 0
  %1470 = vmatprep.subr.bf16.mxu0 0
  %1471 = vmatpush1.bf16.msra.mxu0 0
  %1472 = vmatprep.subr.bf16.mxu0 0
  %1473 = vmatpush1.bf16.msra.mxu0 0
  %1474 = vmatprep.subr.bf16.mxu0 0
  %1475 = vmatpush1.bf16.msra.mxu0 0
  %1476 = vmatprep.subr.bf16.mxu0 0
  %1477 = vmatpush1.bf16.msra.mxu0 0
  %1478 = vmatprep.subr.bf16.mxu0 0
  %1479 = vmatpush1.bf16.msra.mxu0 0
  %1480 = vmatprep.mubr.bf16.mxu0 0
  %1481 = vmatmul.mubr.bf16.gmra.mrb[0].mxu0 %v1330
  %v1482 = vpop.f32.mrb[0].mxu0
  %v1483 = vadd.f32 %v1431, %v1482
  %v1484 = vpop.f32.mrb[0].mxu0
  %v1485 = vpop.f32.mrb[0].mxu0
  %v1486 = vpop.f32.mrb[0].mxu0
  %1487 = vdwg.mxu0
  %v1488 = vld [vmem:[%s13] sm:$0x1]
  %v1490 = vlaneseq
  %v1491 = vshrl.u32 %v1490, 7
  %v1492 = vsub.s32 0, %v1491
  %v1493 = vrot.slane %v1488, %v1492
  %v1495 = vadd.f32 %v1483, %v1493
  %1496 = vst [vmem:[%s14] sm:$0x3] %v1495
  // Predicated region
  $region58: #{vgg_sdn_forward.1} parent=0 // pred_check
    _
  $region59: #{vgg_sdn_forward.1} parent=0 // pred_check_branch
    %1498 = sbr.rel (0) target = $region61
  $region60: #{vgg_sdn_forward.1} parent=0 // pred_region
    _
  $region61: #{vgg_sdn_forward.1} parent=0 // pred_fallthru
    _
  // Predicated region
  $region62: #{vgg_sdn_forward.1} parent=0 // pred_check
    _
  $region63: #{vgg_sdn_forward.1} parent=0 // pred_check_branch
    %1500 = sbr.rel (0) target = $region65
  $region64: #{vgg_sdn_forward.1} parent=0 // pred_region
    _
  $region65: #{vgg_sdn_forward.1} parent=0 // pred_fallthru
    _

</llo_original>
